<compile_context>
chip_gen: v6e
topology: v6e:2x2x1
jax: 0.10.0
libtpu: 0.0.40
codegen_flags: <defaults>
</compile_context>

<pallas_src>
import functools
import numpy as np

import jax
import jax.numpy as jnp
from jax.experimental import pallas as pl
from jax.experimental.pallas import tpu as pltpu

BN_EPS = 1e-5  # PyTorch BatchNorm2d default


# ------------------------------------------------------------------ fused kernel
def _decoder_block_kernel(x_ref, w_ref, s_ref, b_ref, o_ref, pad_ref, col_ref,
                          *, H, W, Cin, Cout, S):
    # x_ref  : (1, H, W, Cin)           one batch element (NHWC)
    # w_ref  : (9*Cin, Cout)            conv weight, tap-major flattened (ky*3+kx, ci)
    # s_ref  : (1, Cout)                folded BN scale  = gamma / sqrt(var + eps)
    # b_ref  : (1, Cout)                folded BN shift  = beta - mean * scale
    # o_ref  : (1, H, S, W, S*Cout)     bit-identical to (H*S, W*S, Cout) row-major
    # pad_ref: (H+2, W+2, Cin)          VMEM scratch for the replication halo
    # col_ref: (H*W, 9*Cin)             VMEM scratch for the im2col matrix

    # --- ReplicationPad2d(1), built entirely in VMEM (no HBM pad pre-pass) ---
    x = x_ref[0]                                             # (H, W, Cin)
    pad_ref[1:H + 1, 1:W + 1, :] = x
    pad_ref[0:1, 1:W + 1, :] = x[0:1, :, :]                  # top edge
    pad_ref[H + 1:H + 2, 1:W + 1, :] = x[H - 1:H, :, :]      # bottom edge
    pad_ref[:, 0:1, :] = pad_ref[:, 1:2, :]                  # left edge (+ corners)
    pad_ref[:, W + 1:W + 2, :] = pad_ref[:, W:W + 1, :]      # right edge (+ corners)

    # --- im2col: one Cin-wide column block per conv tap (tap-major) ---
    for t in range(9):
        ky, kx = divmod(t, 3)
        col_ref[:, t * Cin:(t + 1) * Cin] = (
            pad_ref[ky:ky + H, kx:kx + W, :].reshape(H * W, Cin))

    # --- 3x3 conv (bias=False) as a SINGLE MXU matmul with K = 9*Cin ---
    acc = jnp.dot(col_ref[...], w_ref[...], preferred_element_type=jnp.float32)

    # --- BatchNorm2d (inference affine, precomputed in the wrapper) + ReLU ---
    y = jnp.maximum(acc * s_ref[...] + b_ref[...], 0.0)      # (H*W, Cout)

    # --- nearest-neighbour upsample x S, written straight to the output slab ---
    # Row replication (output rows h*S+i all equal) via a single broadcast; column
    # replication (output cols w*S+j) via S wide stores at lane offset j*Cout.
    yrow = jnp.broadcast_to(y.reshape(1, H, 1, W, Cout), (1, H, S, W, Cout))
    for j in range(S):
        o_ref[0:1, :, :, :, j * Cout:(j + 1) * Cout] = yrow


def _decoder_block_pallas(x_nhwc, w_flat, scale, shift, S):
    N, H, W, Cin = x_nhwc.shape
    Cout = w_flat.shape[-1]
    kernel = functools.partial(_decoder_block_kernel,
                               H=H, W=W, Cin=Cin, Cout=Cout, S=S)
    out5 = pl.pallas_call(
        kernel,
        out_shape=jax.ShapeDtypeStruct((N, H, S, W, S * Cout), jnp.float32),
        grid=(N,),
        in_specs=[
            pl.BlockSpec((1, H, W, Cin), lambda n: (n, 0, 0, 0)),
            pl.BlockSpec((9 * Cin, Cout), lambda n: (0, 0)),
            pl.BlockSpec((1, Cout), lambda n: (0, 0)),
            pl.BlockSpec((1, Cout), lambda n: (0, 0)),
        ],
        out_specs=pl.BlockSpec((1, H, S, W, S * Cout),
                               lambda n: (n, 0, 0, 0, 0)),
        scratch_shapes=[
            pltpu.VMEM((H + 2, W + 2, Cin), jnp.float32),    # replication halo
            pltpu.VMEM((H * W, 9 * Cin), jnp.float32),       # im2col matrix
        ],
        compiler_params=pltpu.CompilerParams(
            dimension_semantics=("parallel",),
            vmem_limit_bytes=32 * 1024 * 1024),
    )(x_nhwc, w_flat, scale, shift)
    # Row-major layouts of (N,H,S,W,S*Cout) and (N,H*S,W*S,Cout) are identical,
    # so this reshape is a free metadata change (no HBM traffic).
    return out5.reshape(N, H * S, W * S, Cout)


# ------------------------------------------------------------------ wrapper
@functools.partial(jax.jit, static_argnames=("upscale_factor",))
def decoder_block_forward(x_nchw, params, upscale_factor=2):
    w = params["conv_w"]                                     # (Cout, Cin, 3, 3)
    Cout, Cin = w.shape[0], w.shape[1]
    # Hoist the BN (inference) affine out of the kernel.
    scale = params["bn_g"] / jnp.sqrt(params["bn_var"] + BN_EPS)
    shift = params["bn_b"] - params["bn_mean"] * scale
    # Conv weight -> tap-major flattened (9*Cin, Cout) for the in-kernel im2col matmul.
    w_flat = jnp.transpose(w, (2, 3, 1, 0)).reshape(9 * Cin, Cout)

    x_nhwc = jnp.transpose(x_nchw, (0, 2, 3, 1))             # NCHW -> NHWC
    out_nhwc = _decoder_block_pallas(x_nhwc, w_flat,
                                     scale.reshape(1, Cout),
                                     shift.reshape(1, Cout),
                                     upscale_factor)
    return jnp.transpose(out_nhwc, (0, 3, 1, 2))             # NHWC -> NCHW


# ------------------------------------------------------------------ pure-JAX reference
def ref_forward(x_nchw, params, upscale_factor=2):
    xp = jnp.pad(x_nchw, ((0, 0), (0, 0), (1, 1), (1, 1)), mode="edge")  # ReplicationPad2d(1)
    y = jax.lax.conv_general_dilated(
        xp, params["conv_w"], (1, 1), "VALID",
        dimension_numbers=("NCHW", "OIHW", "NCHW"),
        precision=jax.lax.Precision.HIGHEST)                             # Conv2d 3x3, bias=False
    scale = params["bn_g"] / jnp.sqrt(params["bn_var"] + BN_EPS)
    shift = params["bn_b"] - params["bn_mean"] * scale
    y = y * scale[None, :, None, None] + shift[None, :, None, None]      # BatchNorm2d (eval)
    y = jnp.maximum(y, 0.0)                                              # ReLU
    s = upscale_factor
    y = jnp.repeat(jnp.repeat(y, s, axis=2), s, axis=3)                  # Upsample (nearest)
    return y


# ------------------------------------------------------------------ main
if __name__ == "__main__":
    key = jax.random.PRNGKey(0)
    kx, kw, kg, kb, km, kv = jax.random.split(key, 6)

    N, Cin, H, W = 2, 4, 16, 16
    Cout, S = 8, 2                                            # out_channels, upscale_factor

    # Inputs/weights snapped to bf16-representable values so the correctness check is
    # independent of the MXU's f32-matmul pass count (the accumulation stays f32-exact).
    x = jax.random.normal(kx, (N, Cin, H, W), jnp.float32)
    x = x.astype(jnp.bfloat16).astype(jnp.float32)
    conv_w = 0.2 * jax.random.normal(kw, (Cout, Cin, 3, 3), jnp.float32)
    conv_w = conv_w.astype(jnp.bfloat16).astype(jnp.float32)

    params = dict(
        conv_w=conv_w,
        bn_g=1.0 + 0.1 * jax.random.normal(kg, (Cout,), jnp.float32),
        bn_b=0.1 * jax.random.normal(kb, (Cout,), jnp.float32),
        bn_mean=0.1 * jax.random.normal(km, (Cout,), jnp.float32),
        bn_var=jnp.abs(jax.random.normal(kv, (Cout,), jnp.float32)) + 0.5,
    )

    out = jax.block_until_ready(decoder_block_forward(x, params, upscale_factor=S))
    assert out.shape == (N, Cout, H * S, W * S), out.shape

    ref = ref_forward(x, params, upscale_factor=S)
    np.testing.assert_allclose(np.asarray(out), np.asarray(ref), atol=1e-4, rtol=1e-4)

    print("KERNEL_OK")
</pallas_src>

<mosaic_0001>
module attributes {stable_mosaic.version = 11 : i64} {
  func.func @_decoder_block_kernel(%arg0: i32, %arg1: memref<1x16x16x4xf32, #tpu.memory_space<vmem>>, %arg2: memref<36x8xf32, #tpu.memory_space<vmem>>, %arg3: memref<1x8xf32, #tpu.memory_space<vmem>>, %arg4: memref<1x8xf32, #tpu.memory_space<vmem>>, %arg5: memref<1x16x2x16x16xf32, #tpu.memory_space<vmem>>, %arg6: memref<18x18x4xf32, #tpu.memory_space<vmem>>, %arg7: memref<256x36xf32, #tpu.memory_space<vmem>>) attributes {dimension_semantics = [#tpu.dimension_semantics<parallel>], iteration_bounds = array<i64: 2>, scalar_prefetch = 0 : i64, scratch_operands = 2 : i64, tpu.core_type = #tpu.core_type<tc>, window_params = [{transform_indices = @transform_0, window_bounds = array<i64: 1, 16, 16, 4>}, {pipeline_mode = #tpu.pipeline_mode<synchronous>, transform_indices = @transform_1, window_bounds = array<i64: 36, 8>}, {pipeline_mode = #tpu.pipeline_mode<synchronous>, transform_indices = @transform_2, window_bounds = array<i64: 1, 8>}, {pipeline_mode = #tpu.pipeline_mode<synchronous>, transform_indices = @transform_3, window_bounds = array<i64: 1, 8>}, {transform_indices = @transform_4, window_bounds = array<i64: 1, 16, 2, 16, 16>}]} {
    %c0 = arith.constant 0 : index
    %c0_0 = arith.constant 0 : index
    %c0_1 = arith.constant 0 : index
    %c0_2 = arith.constant 0 : index
    %0 = vector.load %arg1[%c0, %c0_0, %c0_1, %c0_2] : memref<1x16x16x4xf32, #tpu.memory_space<vmem>>, vector<1x16x16x4xf32>
    %1 = vector.shape_cast %0 : vector<1x16x16x4xf32> to vector<16x16x4xf32>
    %c1 = arith.constant 1 : index
    %c1_3 = arith.constant 1 : index
    %c0_4 = arith.constant 0 : index
    %2 = vector.load %arg6[%c1, %c1_3, %c0_4] : memref<18x18x4xf32, #tpu.memory_space<vmem>>, vector<16x16x4xf32>
    tpu.vector_store %arg6[%c1, %c1_3, %c0_4], %1 {strides = array<i32>} : memref<18x18x4xf32, #tpu.memory_space<vmem>>, vector<16x16x4xf32>,
    %3 = vector.extract_strided_slice %1 {offsets = [0, 0, 0], sizes = [1, 16, 4], strides = [1, 1, 1]} : vector<16x16x4xf32> to vector<1x16x4xf32>
    %c0_5 = arith.constant 0 : index
    %c1_6 = arith.constant 1 : index
    %c0_7 = arith.constant 0 : index
    %4 = vector.load %arg6[%c0_5, %c1_6, %c0_7] : memref<18x18x4xf32, #tpu.memory_space<vmem>>, vector<1x16x4xf32>
    tpu.vector_store %arg6[%c0_5, %c1_6, %c0_7], %3 {strides = array<i32>} : memref<18x18x4xf32, #tpu.memory_space<vmem>>, vector<1x16x4xf32>,
    %5 = vector.extract_strided_slice %1 {offsets = [15, 0, 0], sizes = [1, 16, 4], strides = [1, 1, 1]} : vector<16x16x4xf32> to vector<1x16x4xf32>
    %c17 = arith.constant 17 : index
    %c1_8 = arith.constant 1 : index
    %c0_9 = arith.constant 0 : index
    %6 = vector.load %arg6[%c17, %c1_8, %c0_9] : memref<18x18x4xf32, #tpu.memory_space<vmem>>, vector<1x16x4xf32>
    tpu.vector_store %arg6[%c17, %c1_8, %c0_9], %5 {strides = array<i32>} : memref<18x18x4xf32, #tpu.memory_space<vmem>>, vector<1x16x4xf32>,
    %c0_10 = arith.constant 0 : index
    %c1_11 = arith.constant 1 : index
    %c0_12 = arith.constant 0 : index
    %7 = vector.load %arg6[%c0_10, %c1_11, %c0_12] : memref<18x18x4xf32, #tpu.memory_space<vmem>>, vector<18x1x4xf32>
    %c0_13 = arith.constant 0 : index
    %c0_14 = arith.constant 0 : index
    %c0_15 = arith.constant 0 : index
    %8 = vector.load %arg6[%c0_13, %c0_14, %c0_15] : memref<18x18x4xf32, #tpu.memory_space<vmem>>, vector<18x1x4xf32>
    tpu.vector_store %arg6[%c0_13, %c0_14, %c0_15], %7 {strides = array<i32>} : memref<18x18x4xf32, #tpu.memory_space<vmem>>, vector<18x1x4xf32>,
    %c0_16 = arith.constant 0 : index
    %c16 = arith.constant 16 : index
    %c0_17 = arith.constant 0 : index
    %9 = vector.load %arg6[%c0_16, %c16, %c0_17] : memref<18x18x4xf32, #tpu.memory_space<vmem>>, vector<18x1x4xf32>
    %c0_18 = arith.constant 0 : index
    %c17_19 = arith.constant 17 : index
    %c0_20 = arith.constant 0 : index
    %10 = vector.load %arg6[%c0_18, %c17_19, %c0_20] : memref<18x18x4xf32, #tpu.memory_space<vmem>>, vector<18x1x4xf32>
    tpu.vector_store %arg6[%c0_18, %c17_19, %c0_20], %9 {strides = array<i32>} : memref<18x18x4xf32, #tpu.memory_space<vmem>>, vector<18x1x4xf32>,
    %c0_21 = arith.constant 0 : index
    %c0_22 = arith.constant 0 : index
    %c0_23 = arith.constant 0 : index
    %11 = vector.load %arg6[%c0_21, %c0_22, %c0_23] : memref<18x18x4xf32, #tpu.memory_space<vmem>>, vector<16x16x4xf32>
    %12 = vector.shape_cast %11 : vector<16x16x4xf32> to vector<256x4xf32>
    %c0_24 = arith.constant 0 : index
    %c0_25 = arith.constant 0 : index
    %13 = vector.load %arg7[%c0_24, %c0_25] : memref<256x36xf32, #tpu.memory_space<vmem>>, vector<256x4xf32>
    tpu.vector_store %arg7[%c0_24, %c0_25], %12 {strides = array<i32>} : memref<256x36xf32, #tpu.memory_space<vmem>>, vector<256x4xf32>,
    %c0_26 = arith.constant 0 : index
    %c1_27 = arith.constant 1 : index
    %c0_28 = arith.constant 0 : index
    %14 = vector.load %arg6[%c0_26, %c1_27, %c0_28] : memref<18x18x4xf32, #tpu.memory_space<vmem>>, vector<16x16x4xf32>
    %15 = vector.shape_cast %14 : vector<16x16x4xf32> to vector<256x4xf32>
    %c0_29 = arith.constant 0 : index
    %c4 = arith.constant 4 : index
    %16 = vector.load %arg7[%c0_29, %c4] : memref<256x36xf32, #tpu.memory_space<vmem>>, vector<256x4xf32>
    tpu.vector_store %arg7[%c0_29, %c4], %15 {strides = array<i32>} : memref<256x36xf32, #tpu.memory_space<vmem>>, vector<256x4xf32>,
    %c0_30 = arith.constant 0 : index
    %c2 = arith.constant 2 : index
    %c0_31 = arith.constant 0 : index
    %17 = vector.load %arg6[%c0_30, %c2, %c0_31] : memref<18x18x4xf32, #tpu.memory_space<vmem>>, vector<16x16x4xf32>
    %18 = vector.shape_cast %17 : vector<16x16x4xf32> to vector<256x4xf32>
    %c0_32 = arith.constant 0 : index
    %c8 = arith.constant 8 : index
    %19 = vector.load %arg7[%c0_32, %c8] : memref<256x36xf32, #tpu.memory_space<vmem>>, vector<256x4xf32>
    tpu.vector_store %arg7[%c0_32, %c8], %18 {strides = array<i32>} : memref<256x36xf32, #tpu.memory_space<vmem>>, vector<256x4xf32>,
    %c1_33 = arith.constant 1 : index
    %c0_34 = arith.constant 0 : index
    %c0_35 = arith.constant 0 : index
    %20 = vector.load %arg6[%c1_33, %c0_34, %c0_35] : memref<18x18x4xf32, #tpu.memory_space<vmem>>, vector<16x16x4xf32>
    %21 = vector.shape_cast %20 : vector<16x16x4xf32> to vector<256x4xf32>
    %c0_36 = arith.constant 0 : index
    %c12 = arith.constant 12 : index
    %22 = vector.load %arg7[%c0_36, %c12] : memref<256x36xf32, #tpu.memory_space<vmem>>, vector<256x4xf32>
    tpu.vector_store %arg7[%c0_36, %c12], %21 {strides = array<i32>} : memref<256x36xf32, #tpu.memory_space<vmem>>, vector<256x4xf32>,
    %c1_37 = arith.constant 1 : index
    %c1_38 = arith.constant 1 : index
    %c0_39 = arith.constant 0 : index
    %23 = vector.load %arg6[%c1_37, %c1_38, %c0_39] : memref<18x18x4xf32, #tpu.memory_space<vmem>>, vector<16x16x4xf32>
    %24 = vector.shape_cast %23 : vector<16x16x4xf32> to vector<256x4xf32>
    %c0_40 = arith.constant 0 : index
    %c16_41 = arith.constant 16 : index
    %25 = vector.load %arg7[%c0_40, %c16_41] : memref<256x36xf32, #tpu.memory_space<vmem>>, vector<256x4xf32>
    tpu.vector_store %arg7[%c0_40, %c16_41], %24 {strides = array<i32>} : memref<256x36xf32, #tpu.memory_space<vmem>>, vector<256x4xf32>,
    %c1_42 = arith.constant 1 : index
    %c2_43 = arith.constant 2 : index
    %c0_44 = arith.constant 0 : index
    %26 = vector.load %arg6[%c1_42, %c2_43, %c0_44] : memref<18x18x4xf32, #tpu.memory_space<vmem>>, vector<16x16x4xf32>
    %27 = vector.shape_cast %26 : vector<16x16x4xf32> to vector<256x4xf32>
    %c0_45 = arith.constant 0 : index
    %c20 = arith.constant 20 : index
    %28 = vector.load %arg7[%c0_45, %c20] : memref<256x36xf32, #tpu.memory_space<vmem>>, vector<256x4xf32>
    tpu.vector_store %arg7[%c0_45, %c20], %27 {strides = array<i32>} : memref<256x36xf32, #tpu.memory_space<vmem>>, vector<256x4xf32>,
    %c2_46 = arith.constant 2 : index
    %c0_47 = arith.constant 0 : index
    %c0_48 = arith.constant 0 : index
    %29 = vector.load %arg6[%c2_46, %c0_47, %c0_48] : memref<18x18x4xf32, #tpu.memory_space<vmem>>, vector<16x16x4xf32>
    %30 = vector.shape_cast %29 : vector<16x16x4xf32> to vector<256x4xf32>
    %c0_49 = arith.constant 0 : index
    %c24 = arith.constant 24 : index
    %31 = vector.load %arg7[%c0_49, %c24] : memref<256x36xf32, #tpu.memory_space<vmem>>, vector<256x4xf32>
    tpu.vector_store %arg7[%c0_49, %c24], %30 {strides = array<i32>} : memref<256x36xf32, #tpu.memory_space<vmem>>, vector<256x4xf32>,
    %c2_50 = arith.constant 2 : index
    %c1_51 = arith.constant 1 : index
    %c0_52 = arith.constant 0 : index
    %32 = vector.load %arg6[%c2_50, %c1_51, %c0_52] : memref<18x18x4xf32, #tpu.memory_space<vmem>>, vector<16x16x4xf32>
    %33 = vector.shape_cast %32 : vector<16x16x4xf32> to vector<256x4xf32>
    %c0_53 = arith.constant 0 : index
    %c28 = arith.constant 28 : index
    %34 = vector.load %arg7[%c0_53, %c28] : memref<256x36xf32, #tpu.memory_space<vmem>>, vector<256x4xf32>
    tpu.vector_store %arg7[%c0_53, %c28], %33 {strides = array<i32>} : memref<256x36xf32, #tpu.memory_space<vmem>>, vector<256x4xf32>,
    %c2_54 = arith.constant 2 : index
    %c2_55 = arith.constant 2 : index
    %c0_56 = arith.constant 0 : index
    %35 = vector.load %arg6[%c2_54, %c2_55, %c0_56] : memref<18x18x4xf32, #tpu.memory_space<vmem>>, vector<16x16x4xf32>
    %36 = vector.shape_cast %35 : vector<16x16x4xf32> to vector<256x4xf32>
    %c0_57 = arith.constant 0 : index
    %c32 = arith.constant 32 : index
    %37 = vector.load %arg7[%c0_57, %c32] : memref<256x36xf32, #tpu.memory_space<vmem>>, vector<256x4xf32>
    tpu.vector_store %arg7[%c0_57, %c32], %36 {strides = array<i32>} : memref<256x36xf32, #tpu.memory_space<vmem>>, vector<256x4xf32>,
    %c0_58 = arith.constant 0 : index
    %c0_59 = arith.constant 0 : index
    %38 = vector.load %arg7[%c0_58, %c0_59] : memref<256x36xf32, #tpu.memory_space<vmem>>, vector<256x36xf32>
    %c0_60 = arith.constant 0 : index
    %c0_61 = arith.constant 0 : index
    %39 = vector.load %arg2[%c0_60, %c0_61] : memref<36x8xf32, #tpu.memory_space<vmem>>, vector<36x8xf32>
    %cst = arith.constant dense<0.000000e+00> : vector<256x8xf32>
    %40 = tpu.matmul %38, %39, %cst {dimension_numbers = #tpu.dot_dimension_numbers<[1], [0], [0], [1], [0, 0, 1, 1], [], []>} : vector<256x36xf32>, vector<36x8xf32>, vector<256x8xf32> -> vector<256x8xf32>
    %c0_62 = arith.constant 0 : index
    %c0_63 = arith.constant 0 : index
    %41 = vector.load %arg3[%c0_62, %c0_63] : memref<1x8xf32, #tpu.memory_space<vmem>>, vector<1x8xf32>
    %42 = vector.broadcast %41 : vector<1x8xf32> to vector<256x8xf32>
    %43 = arith.mulf %40, %42 : vector<256x8xf32>
    %c0_64 = arith.constant 0 : index
    %c0_65 = arith.constant 0 : index
    %44 = vector.load %arg4[%c0_64, %c0_65] : memref<1x8xf32, #tpu.memory_space<vmem>>, vector<1x8xf32>
    %45 = vector.broadcast %44 : vector<1x8xf32> to vector<256x8xf32>
    %46 = arith.addf %43, %45 : vector<256x8xf32>
    %cst_66 = arith.constant 0.000000e+00 : f32
    %47 = vector.broadcast %cst_66 : f32 to vector<256x8xf32>
    %48 = arith.maximumf %46, %47 : vector<256x8xf32>
    %49 = vector.shape_cast %48 : vector<256x8xf32> to vector<1x16x1x16x8xf32>
    %50 = vector.shape_cast %49 : vector<1x16x1x16x8xf32> to vector<1x16x1x16x8xf32>
    %51 = vector.broadcast %50 : vector<1x16x1x16x8xf32> to vector<1x16x2x16x8xf32>
    %c0_67 = arith.constant 0 : index
    %c0_68 = arith.constant 0 : index
    %c0_69 = arith.constant 0 : index
    %c0_70 = arith.constant 0 : index
    %c0_71 = arith.constant 0 : index
    %52 = vector.load %arg5[%c0_67, %c0_68, %c0_69, %c0_70, %c0_71] : memref<1x16x2x16x16xf32, #tpu.memory_space<vmem>>, vector<1x16x2x16x8xf32>
    tpu.vector_store %arg5[%c0_67, %c0_68, %c0_69, %c0_70, %c0_71], %51 {strides = array<i32>} : memref<1x16x2x16x16xf32, #tpu.memory_space<vmem>>, vector<1x16x2x16x8xf32>,
    %c0_72 = arith.constant 0 : index
    %c0_73 = arith.constant 0 : index
    %c0_74 = arith.constant 0 : index
    %c0_75 = arith.constant 0 : index
    %c8_76 = arith.constant 8 : index
    %53 = vector.load %arg5[%c0_72, %c0_73, %c0_74, %c0_75, %c8_76] : memref<1x16x2x16x16xf32, #tpu.memory_space<vmem>>, vector<1x16x2x16x8xf32>
    tpu.vector_store %arg5[%c0_72, %c0_73, %c0_74, %c0_75, %c8_76], %51 {strides = array<i32>} : memref<1x16x2x16x16xf32, #tpu.memory_space<vmem>>, vector<1x16x2x16x8xf32>,
    return
  }
  func.func @transform_0(%arg0: i32) -> (i32, i32, i32, i32) {
    %c0_i32 = arith.constant 0 : i32
    %c0_i32_0 = arith.constant 0 : i32
    %c0_i32_1 = arith.constant 0 : i32
    %c0_i32_2 = arith.constant 0 : i32
    return %arg0, %c0_i32, %c0_i32_0, %c0_i32_1 : i32, i32, i32, i32
  }
  func.func @transform_1(%arg0: i32) -> (i32, i32) {
    %c0_i32 = arith.constant 0 : i32
    %c0_i32_0 = arith.constant 0 : i32
    %c0_i32_1 = arith.constant 0 : i32
    return %c0_i32, %c0_i32_0 : i32, i32
  }
  func.func @transform_2(%arg0: i32) -> (i32, i32) {
    %c0_i32 = arith.constant 0 : i32
    %c0_i32_0 = arith.constant 0 : i32
    %c0_i32_1 = arith.constant 0 : i32
    return %c0_i32, %c0_i32_0 : i32, i32
  }
  func.func @transform_3(%arg0: i32) -> (i32, i32) {
    %c0_i32 = arith.constant 0 : i32
    %c0_i32_0 = arith.constant 0 : i32
    %c0_i32_1 = arith.constant 0 : i32
    return %c0_i32, %c0_i32_0 : i32, i32
  }
  func.func @transform_4(%arg0: i32) -> (i32, i32, i32, i32, i32) {
    %c0_i32 = arith.constant 0 : i32
    %c0_i32_0 = arith.constant 0 : i32
    %c0_i32_1 = arith.constant 0 : i32
    %c0_i32_2 = arith.constant 0 : i32
    %c0_i32_3 = arith.constant 0 : i32
    return %arg0, %c0_i32, %c0_i32_0, %c0_i32_1, %c0_i32_2 : i32, i32, i32, i32, i32
  }
}

</mosaic_0001>

<llo_original>
// kernel: decoder_block_forward.1
$region0: #{decoder_block_forward.1}
  #allocation0 [shape = 'u32[]', space=smem, size = 0x4, offset = 0x4, fixed_abs, tag = 'smem constant byte address 0x4 - core index']
  #allocation1 [shape = 'u32[144,128]{1,0:T(1,128)}', space=vmem, size = 0x12000, scoped, tag = 'internal scratch']
  #allocation2 [shape = 'f32[18,18,4]{2,1,0:T(8,128)}', space=vmem, size = 0x36000, scoped, tag = 'scratch operand']
  #allocation3 [shape = 'f32[256,36]{1,0:T(8,128)}', space=vmem, size = 0x20000, scoped, tag = 'scratch operand']
  %s0 = inlined_call_operand.vmem [shape: f32[2,16,16,4], index: 0, kind: input, shape index: {}]
  %s1 = inlined_call_operand.vmem [shape: f32[36,8], index: 1, kind: input, shape index: {}]
  %s2 = inlined_call_operand.vmem [shape: f32[1,8], index: 2, kind: input, shape index: {}]
  %s3 = inlined_call_operand.vmem [shape: f32[1,8], index: 3, kind: input, shape index: {}]
  %s4 = inlined_call_operand.vmem [shape: f32[2,16,2,16,16], index: 4, kind: output, shape index: {}]
  %s5 = sld [smem:[#allocation0]]
  $region49: #{decoder_block_forward.1} parent=0
    _
  %s7 = ssub.s32 1, %s5
  %s8 = scalar_select 0, %s7, %s5
  loop: start=0, step=1, limit=4
  $region2: #{decoder_block_forward.1} parent=0 // loop_pre_header
    _
  $region3: #{decoder_block_forward.1} parent=0 // loop_header
    %s10 = sphi 0, %s14
    %p11 = scmp.ge.s32.totalorder %s10, 4
    %s20 = sphi 0, %s22
    %s23 = sphi 0, %s20
    %s24 = sphi 0, %s23
    %s40 = sphi 0, %s24
    %s44 = sphi 0, %s44
    %s46 = sphi 0, %s44
    %s47 = sphi 0, %s46
    %s61 = sphi 0, %s47
    %s65 = sphi 0, %s65
    %s67 = sphi 0, %s65
    %s68 = sphi 0, %s67
    %s82 = sphi 0, %s68
    %s86 = sphi 0, %s86
    %s88 = sphi 0, %s86
    %s89 = sphi 0, %s88
    %s103 = sphi 0, %s89
    %s109 = sphi 0, %s111
    %s112 = sphi 0, %s109
    %s113 = sphi 0, %s112
    %s129 = sphi 0, %s113
  $region4: #{decoder_block_forward.1} parent=0 // loop_header_branch
    %13 = sbr.rel (%p11) target = $region8
  $region5: #{decoder_block_forward.1} parent=0 // loop_body
    %s15 = ssub.s32 %s10, 1
    %s16 = ssub.s32 %s10, 2
    %s17 = sadd.s32 %s10, 1
    %s18 = ssub.s32 %s10, %s17
    %p19 = scmp.eq.s32.totalorder %s18, 0
    %s21 = sadd.s32 %s20, 1
    %s22 = scalar_select %p19, %s20, %s21
    %p25 = pneg %p19
    %p26 = scmp.eq.s32.totalorder %s10, 1
    %p27 = por %p25, %p26
    %p28 = scmp.ne.s32.totalorder %s20, %s23
    %p29 = scmp.eq.s32.totalorder %s10, 0
    %p30 = por %p28, %p29
    %p31 = scmp.ne.s32.totalorder %s20, %s23
    %p32 = scmp.eq.s32.totalorder %s15, 1
    %p33 = por %p31, %p32
    %p34 = scmp.ne.s32.totalorder %s23, %s24
    %p35 = scmp.eq.s32.totalorder %s15, 0
    %p36 = por %p34, %p35
    %p37 = scmp.ne.s32.totalorder %s23, %s24
    %p38 = scmp.eq.s32.totalorder %s16, 1
    %p39 = por %p37, %p38
    %p41 = scmp.ne.s32.totalorder %s24, %s40
    %p42 = scmp.eq.s32.totalorder %s16, 0
    %p43 = por %p41, %p42
    %s45 = sadd.s32 %s44, 1
    %p48 = scmp.eq.s32.totalorder %s10, 1
    %p49 = scmp.ne.s32.totalorder %s44, %s46
    %p50 = scmp.eq.s32.totalorder %s10, 0
    %p51 = por %p49, %p50
    %p52 = scmp.ne.s32.totalorder %s44, %s46
    %p53 = scmp.eq.s32.totalorder %s15, 1
    %p54 = por %p52, %p53
    %p55 = scmp.ne.s32.totalorder %s46, %s47
    %p56 = scmp.eq.s32.totalorder %s15, 0
    %p57 = por %p55, %p56
    %p58 = scmp.ne.s32.totalorder %s46, %s47
    %p59 = scmp.eq.s32.totalorder %s16, 1
    %p60 = por %p58, %p59
    %p62 = scmp.ne.s32.totalorder %s47, %s61
    %p63 = scmp.eq.s32.totalorder %s16, 0
    %p64 = por %p62, %p63
    %s66 = sadd.s32 %s65, 1
    %p69 = scmp.eq.s32.totalorder %s10, 1
    %p70 = scmp.ne.s32.totalorder %s65, %s67
    %p71 = scmp.eq.s32.totalorder %s10, 0
    %p72 = por %p70, %p71
    %p73 = scmp.ne.s32.totalorder %s65, %s67
    %p74 = scmp.eq.s32.totalorder %s15, 1
    %p75 = por %p73, %p74
    %p76 = scmp.ne.s32.totalorder %s67, %s68
    %p77 = scmp.eq.s32.totalorder %s15, 0
    %p78 = por %p76, %p77
    %p79 = scmp.ne.s32.totalorder %s67, %s68
    %p80 = scmp.eq.s32.totalorder %s16, 1
    %p81 = por %p79, %p80
    %p83 = scmp.ne.s32.totalorder %s68, %s82
    %p84 = scmp.eq.s32.totalorder %s16, 0
    %p85 = por %p83, %p84
    %s87 = sadd.s32 %s86, 1
    %p90 = scmp.eq.s32.totalorder %s10, 1
    %p91 = scmp.ne.s32.totalorder %s86, %s88
    %p92 = scmp.eq.s32.totalorder %s10, 0
    %p93 = por %p91, %p92
    %p94 = scmp.ne.s32.totalorder %s86, %s88
    %p95 = scmp.eq.s32.totalorder %s15, 1
    %p96 = por %p94, %p95
    %p97 = scmp.ne.s32.totalorder %s88, %s89
    %p98 = scmp.eq.s32.totalorder %s15, 0
    %p99 = por %p97, %p98
    %p100 = scmp.ne.s32.totalorder %s88, %s89
    %p101 = scmp.eq.s32.totalorder %s16, 1
    %p102 = por %p100, %p101
    %p104 = scmp.ne.s32.totalorder %s89, %s103
    %p105 = scmp.eq.s32.totalorder %s16, 0
    %p106 = por %p104, %p105
    %s107 = ssub.s32 %s10, %s17
    %p108 = scmp.eq.s32.totalorder %s107, 0
    %s110 = sadd.s32 %s109, 1
    %s111 = scalar_select %p108, %s109, %s110
    %p114 = pneg %p108
    %p115 = scmp.eq.s32.totalorder %s10, 1
    %p116 = por %p114, %p115
    %p117 = scmp.ne.s32.totalorder %s109, %s112
    %p118 = scmp.eq.s32.totalorder %s10, 0
    %p119 = por %p117, %p118
    %p120 = scmp.ne.s32.totalorder %s109, %s112
    %p121 = scmp.eq.s32.totalorder %s15, 1
    %p122 = por %p120, %p121
    %p123 = scmp.ne.s32.totalorder %s112, %s113
    %p124 = scmp.eq.s32.totalorder %s15, 0
    %p125 = por %p123, %p124
    %p126 = scmp.ne.s32.totalorder %s112, %s113
    %p127 = scmp.eq.s32.totalorder %s16, 1
    %p128 = por %p126, %p127
    %p130 = scmp.ne.s32.totalorder %s113, %s129
    %p131 = scmp.eq.s32.totalorder %s16, 0
    %p132 = por %p130, %p131
    %p133 = scmp.le.s32.totalorder 1, %s10
    %p134 = scmp.lt.s32.totalorder %s10, 3
    %p135 = pnand %p133, %p134
    %p136 = pneg %p135
    // Predicated region
    $region9: #{decoder_block_forward.1} parent=5 // pred_check
      _
    $region10: #{decoder_block_forward.1} parent=5 // pred_check_branch
      %138 = sbr.rel (%p135) target = $region12
    $region11: #{decoder_block_forward.1} parent=5 // pred_region
      %s139 = ssub.s32 %s10, 1
      // Predicated region
      $region13: #{decoder_block_forward.1} parent=11 // pred_check
        %p140 = pneg %p57
      $region14: #{decoder_block_forward.1} parent=11 // pred_check_branch
        %142 = sbr.rel (%p140) target = $region16
      $region15: #{decoder_block_forward.1} parent=11 // pred_region
        _
      $region16: #{decoder_block_forward.1} parent=11 // pred_fallthru
        _
      // Predicated region
      $region17: #{decoder_block_forward.1} parent=11 // pred_check
        %p143 = pneg %p78
      $region18: #{decoder_block_forward.1} parent=11 // pred_check_branch
        %145 = sbr.rel (%p143) target = $region20
      $region19: #{decoder_block_forward.1} parent=11 // pred_region
        _
      $region20: #{decoder_block_forward.1} parent=11 // pred_fallthru
        _
      // Predicated region
      $region21: #{decoder_block_forward.1} parent=11 // pred_check
        %p146 = pneg %p99
      $region22: #{decoder_block_forward.1} parent=11 // pred_check_branch
        %148 = sbr.rel (%p146) target = $region24
      $region23: #{decoder_block_forward.1} parent=11 // pred_region
        _
      $region24: #{decoder_block_forward.1} parent=11 // pred_fallthru
        _
    $region12: #{decoder_block_forward.1} parent=5 // pred_fallthru
      _
    %p149 = scmp.lt.s32.totalorder %s10, 2
    // Predicated region
    $region25: #{decoder_block_forward.1} parent=5 // pred_check
      %p150 = pneg %p149
    $region26: #{decoder_block_forward.1} parent=5 // pred_check_branch
      %152 = sbr.rel (%p150) target = $region28
    $region27: #{decoder_block_forward.1} parent=5 // pred_region
      // Predicated region
      $region29: #{decoder_block_forward.1} parent=27 // pred_check
        %p153 = pneg %p30
      $region30: #{decoder_block_forward.1} parent=27 // pred_check_branch
        %155 = sbr.rel (%p153) target = $region32
      $region31: #{decoder_block_forward.1} parent=27 // pred_region
        %p156 = scmp.lt.s32.totalorder %s10, 1
        %s157 = scalar_select %p156, %s10, 1
        %s158 = smul.addr %s157, 32
        %s159 = smul.addr %s158, 8
        %s160 = scalar_lea.vmem %s0, %s159
      $region32: #{decoder_block_forward.1} parent=27 // pred_fallthru
        _
    $region28: #{decoder_block_forward.1} parent=5 // pred_fallthru
      _
    %p161 = scmp.le.s32.totalorder 1, %s10
    %p162 = scmp.lt.s32.totalorder %s10, 3
    %p163 = pnand %p161, %p162
    %p164 = pneg %p163
    // Predicated region
    $region33: #{decoder_block_forward.1} parent=5 // pred_check
      _
    $region34: #{decoder_block_forward.1} parent=5 // pred_check_branch
      %166 = sbr.rel (%p163) target = $region36
    $region35: #{decoder_block_forward.1} parent=5 // pred_region
      %s167 = ssub.s32 %s10, 1
      %p168 = scmp.lt.s32.totalorder %s15, 1
      %s169 = scalar_select %p168, %s15, 1
      %s170 = smul.addr %s169, 32
      %s171 = smul.addr %s170, 8
      %s172 = scalar_lea.vmem %s0, %s171
      %p173 = pneg %p36
      %p174 = pneg %p33
      %p175 = pneg %p57
      %p176 = pneg %p54
      %p177 = pneg %p78
      %p178 = pneg %p75
      %p179 = pneg %p99
      %p180 = pneg %p96
      %p181 = pneg %p125
      %p182 = pneg %p122
      %p183 = scmp.lt.s32.totalorder %s15, 1
      %s184 = scalar_select %p183, %s15, 1
      %s185 = smul.addr %s184, 64
      %s186 = smul.addr %s185, 8
      %s187 = scalar_lea.vmem %s4, %s186
      %p188 = scmp.lt.s32.totalorder %s15, 1
      %s189 = scalar_select %p188, %s15, 1
      %s190 = smul.addr %s189, 32
      %s191 = smul.addr %s190, 8
      %s192 = scalar_lea.vmem %s0, %s191
      %p193 = scmp.lt.s32.totalorder %s15, 1
      %s194 = scalar_select %p193, %s15, 1
      %s195 = smul.addr %s194, 64
      %s196 = smul.addr %s195, 8
      %s197 = scalar_lea.vmem %s4, %s196
      %v198 = vld [vmem:[%s192] sm:$0xff]
      %v199 = vld [vmem:[%s192 + $0x8] sm:$0xff]
      %v200 = vld [vmem:[%s192 + $0x10] sm:$0xff]
      %v201 = vld [vmem:[%s192 + $0x18] sm:$0xff]
      %v202 = vld [vmem:[%s192 + $0x20] sm:$0xff]
      %v203 = vld [vmem:[%s192 + $0x28] sm:$0xff]
      %v204 = vld [vmem:[%s192 + $0x30] sm:$0xff]
      %v205 = vld [vmem:[%s192 + $0x38] sm:$0xff]
      %v206 = vld [vmem:[%s192 + $0x40] sm:$0xff]
      %v207 = vld [vmem:[%s192 + $0x48] sm:$0xff]
      %v208 = vld [vmem:[%s192 + $0x50] sm:$0xff]
      %v209 = vld [vmem:[%s192 + $0x58] sm:$0xff]
      %v210 = vld [vmem:[%s192 + $0x60] sm:$0xff]
      %v211 = vld [vmem:[%s192 + $0x68] sm:$0xff]
      %v212 = vld [vmem:[%s192 + $0x70] sm:$0xff]
      %v213 = vld [vmem:[%s192 + $0x78] sm:$0xff]
      %v214 = vld [vmem:[%s192 + $0x80] sm:$0xff]
      %v215 = vld [vmem:[%s192 + $0x88] sm:$0xff]
      %v216 = vld [vmem:[%s192 + $0x90] sm:$0xff]
      %v217 = vld [vmem:[%s192 + $0x98] sm:$0xff]
      %v218 = vld [vmem:[%s192 + $0xa0] sm:$0xff]
      %v219 = vld [vmem:[%s192 + $0xa8] sm:$0xff]
      %v220 = vld [vmem:[%s192 + $0xb0] sm:$0xff]
      %v221 = vld [vmem:[%s192 + $0xb8] sm:$0xff]
      %v222 = vld [vmem:[%s192 + $0xc0] sm:$0xff]
      %v223 = vld [vmem:[%s192 + $0xc8] sm:$0xff]
      %v224 = vld [vmem:[%s192 + $0xd0] sm:$0xff]
      %v225 = vld [vmem:[%s192 + $0xd8] sm:$0xff]
      %v226 = vld [vmem:[%s192 + $0xe0] sm:$0xff]
      %v227 = vld [vmem:[%s192 + $0xe8] sm:$0xff]
      %v228 = vld [vmem:[%s192 + $0xf0] sm:$0xff]
      %v229 = vld [vmem:[%s192 + $0xf8] sm:$0xff]
      %s230 = scalar_lea.vmem [#allocation2], 24
      %vm231 = vcmask 31744
      %232 = vst.msk [vmem:[%s230 + $0x1] sm:$0xff] %vm231, %v198
      %233 = vst.msk [vmem:[%s230 + $0x9] sm:$0xff] %vm231, %v199
      %234 = vst.msk [vmem:[%s230 + $0x19] sm:$0xff] %vm231, %v200
      %235 = vst.msk [vmem:[%s230 + $0x21] sm:$0xff] %vm231, %v201
      %236 = vst.msk [vmem:[%s230 + $0x31] sm:$0xff] %vm231, %v202
      %237 = vst.msk [vmem:[%s230 + $0x39] sm:$0xff] %vm231, %v203
      %238 = vst.msk [vmem:[%s230 + $0x49] sm:$0xff] %vm231, %v204
      %239 = vst.msk [vmem:[%s230 + $0x51] sm:$0xff] %vm231, %v205
      %240 = vst.msk [vmem:[%s230 + $0x61] sm:$0xff] %vm231, %v206
      %241 = vst.msk [vmem:[%s230 + $0x69] sm:$0xff] %vm231, %v207
      %242 = vst.msk [vmem:[%s230 + $0x79] sm:$0xff] %vm231, %v208
      %243 = vst.msk [vmem:[%s230 + $0x81] sm:$0xff] %vm231, %v209
      %244 = vst.msk [vmem:[%s230 + $0x91] sm:$0xff] %vm231, %v210
      %245 = vst.msk [vmem:[%s230 + $0x99] sm:$0xff] %vm231, %v211
      %246 = vst.msk [vmem:[%s230 + $0xa9] sm:$0xff] %vm231, %v212
      %247 = vst.msk [vmem:[%s230 + $0xb1] sm:$0xff] %vm231, %v213
      %248 = vst.msk [vmem:[%s230 + $0xc1] sm:$0xff] %vm231, %v214
      %249 = vst.msk [vmem:[%s230 + $0xc9] sm:$0xff] %vm231, %v215
      %250 = vst.msk [vmem:[%s230 + $0xd9] sm:$0xff] %vm231, %v216
      %251 = vst.msk [vmem:[%s230 + $0xe1] sm:$0xff] %vm231, %v217
      %252 = vst.msk [vmem:[%s230 + $0xf1] sm:$0xff] %vm231, %v218
      %253 = vst.msk [vmem:[%s230 + $0xf9] sm:$0xff] %vm231, %v219
      %254 = vst.msk [vmem:[%s230 + $0x109] sm:$0xff] %vm231, %v220
      %255 = vst.msk [vmem:[%s230 + $0x111] sm:$0xff] %vm231, %v221
      %256 = vst.msk [vmem:[%s230 + $0x121] sm:$0xff] %vm231, %v222
      %257 = vst.msk [vmem:[%s230 + $0x129] sm:$0xff] %vm231, %v223
      %258 = vst.msk [vmem:[%s230 + $0x139] sm:$0xff] %vm231, %v224
      %259 = vst.msk [vmem:[%s230 + $0x141] sm:$0xff] %vm231, %v225
      %260 = vst.msk [vmem:[%s230 + $0x151] sm:$0xff] %vm231, %v226
      %261 = vst.msk [vmem:[%s230 + $0x159] sm:$0xff] %vm231, %v227
      %262 = vst.msk [vmem:[%s230 + $0x169] sm:$0xff] %vm231, %v228
      %263 = vst.msk [vmem:[%s230 + $0x171] sm:$0xff] %vm231, %v229
      %264 = vst.msk [vmem:[#allocation2 + $0x1] sm:$0xff] %vm231, %v198
      %265 = vst.msk [vmem:[#allocation2 + $0x9] sm:$0xff] %vm231, %v199
      %s266 = scalar_lea.vmem [#allocation2], 408
      %267 = vst.msk [vmem:[%s266 + $0x1] sm:$0xff] %vm231, %v228
      %268 = vst.msk [vmem:[%s266 + $0x9] sm:$0xff] %vm231, %v229
      %v269 = vld [vmem:[#allocation2 + $0x1] sm:$0x1]
      %v270 = vld [vmem:[#allocation2 + $0x19] sm:$0x1]
      %v271 = vld [vmem:[#allocation2 + $0x31] sm:$0x1]
      %v272 = vld [vmem:[#allocation2 + $0x49] sm:$0x1]
      %v273 = vld [vmem:[#allocation2 + $0x61] sm:$0x1]
      %v274 = vld [vmem:[#allocation2 + $0x79] sm:$0x1]
      %v275 = vld [vmem:[#allocation2 + $0x91] sm:$0x1]
      %v276 = vld [vmem:[#allocation2 + $0xa9] sm:$0x1]
      %v277 = vld [vmem:[#allocation2 + $0xc1] sm:$0x1]
      %v278 = vld [vmem:[#allocation2 + $0xd9] sm:$0x1]
      %v279 = vld [vmem:[#allocation2 + $0xf1] sm:$0x1]
      %v280 = vld [vmem:[#allocation2 + $0x109] sm:$0x1]
      %v281 = vld [vmem:[#allocation2 + $0x121] sm:$0x1]
      %v282 = vld [vmem:[#allocation2 + $0x139] sm:$0x1]
      %v283 = vld [vmem:[#allocation2 + $0x151] sm:$0x1]
      %v284 = vld [vmem:[#allocation2 + $0x169] sm:$0x1]
      %v285 = vld [vmem:[#allocation2 + $0x181] sm:$0x1]
      %v286 = vld [vmem:[#allocation2 + $0x199] sm:$0x1]
      %vm287 = vcmask 24576
      %288 = vst.msk [vmem:[#allocation2] sm:$0x1] %vm287, %v269
      %289 = vst.msk [vmem:[#allocation2 + $0x18] sm:$0x1] %vm287, %v270
      %290 = vst.msk [vmem:[#allocation2 + $0x30] sm:$0x1] %vm287, %v271
      %291 = vst.msk [vmem:[#allocation2 + $0x48] sm:$0x1] %vm287, %v272
      %292 = vst.msk [vmem:[#allocation2 + $0x60] sm:$0x1] %vm287, %v273
      %293 = vst.msk [vmem:[#allocation2 + $0x78] sm:$0x1] %vm287, %v274
      %294 = vst.msk [vmem:[#allocation2 + $0x90] sm:$0x1] %vm287, %v275
      %295 = vst.msk [vmem:[#allocation2 + $0xa8] sm:$0x1] %vm287, %v276
      %296 = vst.msk [vmem:[#allocation2 + $0xc0] sm:$0x1] %vm287, %v277
      %297 = vst.msk [vmem:[#allocation2 + $0xd8] sm:$0x1] %vm287, %v278
      %298 = vst.msk [vmem:[#allocation2 + $0xf0] sm:$0x1] %vm287, %v279
      %299 = vst.msk [vmem:[#allocation2 + $0x108] sm:$0x1] %vm287, %v280
      %300 = vst.msk [vmem:[#allocation2 + $0x120] sm:$0x1] %vm287, %v281
      %301 = vst.msk [vmem:[#allocation2 + $0x138] sm:$0x1] %vm287, %v282
      %302 = vst.msk [vmem:[#allocation2 + $0x150] sm:$0x1] %vm287, %v283
      %303 = vst.msk [vmem:[#allocation2 + $0x168] sm:$0x1] %vm287, %v284
      %304 = vst.msk [vmem:[#allocation2 + $0x180] sm:$0x1] %vm287, %v285
      %305 = vst.msk [vmem:[#allocation2 + $0x198] sm:$0x1] %vm287, %v286
      %v306 = vld [vmem:[#allocation2 + $0x10] sm:$0x1]
      %v307 = vld [vmem:[#allocation2 + $0x28] sm:$0x1]
      %v308 = vld [vmem:[#allocation2 + $0x40] sm:$0x1]
      %v309 = vld [vmem:[#allocation2 + $0x58] sm:$0x1]
      %v310 = vld [vmem:[#allocation2 + $0x70] sm:$0x1]
      %v311 = vld [vmem:[#allocation2 + $0x88] sm:$0x1]
      %v312 = vld [vmem:[#allocation2 + $0xa0] sm:$0x1]
      %v313 = vld [vmem:[#allocation2 + $0xb8] sm:$0x1]
      %v314 = vld [vmem:[#allocation2 + $0xd0] sm:$0x1]
      %v315 = vld [vmem:[#allocation2 + $0xe8] sm:$0x1]
      %v316 = vld [vmem:[#allocation2 + $0x100] sm:$0x1]
      %v317 = vld [vmem:[#allocation2 + $0x118] sm:$0x1]
      %v318 = vld [vmem:[#allocation2 + $0x130] sm:$0x1]
      %v319 = vld [vmem:[#allocation2 + $0x148] sm:$0x1]
      %v320 = vld [vmem:[#allocation2 + $0x160] sm:$0x1]
      %v321 = vld [vmem:[#allocation2 + $0x178] sm:$0x1]
      %v322 = vld [vmem:[#allocation2 + $0x190] sm:$0x1]
      %v323 = vld [vmem:[#allocation2 + $0x1a8] sm:$0x1]
      %324 = vst.msk [vmem:[#allocation2 + $0x11] sm:$0x1] %vm287, %v306
      %325 = vst.msk [vmem:[#allocation2 + $0x29] sm:$0x1] %vm287, %v307
      %326 = vst.msk [vmem:[#allocation2 + $0x41] sm:$0x1] %vm287, %v308
      %327 = vst.msk [vmem:[#allocation2 + $0x59] sm:$0x1] %vm287, %v309
      %328 = vst.msk [vmem:[#allocation2 + $0x71] sm:$0x1] %vm287, %v310
      %329 = vst.msk [vmem:[#allocation2 + $0x89] sm:$0x1] %vm287, %v311
      %330 = vst.msk [vmem:[#allocation2 + $0xa1] sm:$0x1] %vm287, %v312
      %331 = vst.msk [vmem:[#allocation2 + $0xb9] sm:$0x1] %vm287, %v313
      %332 = vst.msk [vmem:[#allocation2 + $0xd1] sm:$0x1] %vm287, %v314
      %333 = vst.msk [vmem:[#allocation2 + $0xe9] sm:$0x1] %vm287, %v315
      %334 = vst.msk [vmem:[#allocation2 + $0x101] sm:$0x1] %vm287, %v316
      %335 = vst.msk [vmem:[#allocation2 + $0x119] sm:$0x1] %vm287, %v317
      %336 = vst.msk [vmem:[#allocation2 + $0x131] sm:$0x1] %vm287, %v318
      %337 = vst.msk [vmem:[#allocation2 + $0x149] sm:$0x1] %vm287, %v319
      %338 = vst.msk [vmem:[#allocation2 + $0x161] sm:$0x1] %vm287, %v320
      %339 = vst.msk [vmem:[#allocation2 + $0x179] sm:$0x1] %vm287, %v321
      %340 = vst.msk [vmem:[#allocation2 + $0x191] sm:$0x1] %vm287, %v322
      %341 = vst.msk [vmem:[#allocation2 + $0x1a9] sm:$0x1] %vm287, %v323
      %v342 = vld [vmem:[#allocation2] sm:$0xff]
      %v343 = vld [vmem:[#allocation2 + $0x8] sm:$0xff]
      %v344 = vld [vmem:[#allocation2 + $0x18] sm:$0xff]
      %v345 = vld [vmem:[#allocation2 + $0x20] sm:$0xff]
      %v346 = vld [vmem:[#allocation2 + $0x30] sm:$0xff]
      %v347 = vld [vmem:[#allocation2 + $0x38] sm:$0xff]
      %v348 = vld [vmem:[#allocation2 + $0x48] sm:$0xff]
      %v349 = vld [vmem:[#allocation2 + $0x50] sm:$0xff]
      %v350 = vld [vmem:[#allocation2 + $0x60] sm:$0xff]
      %v351 = vld [vmem:[#allocation2 + $0x68] sm:$0xff]
      %v352 = vld [vmem:[#allocation2 + $0x78] sm:$0xff]
      %v353 = vld [vmem:[#allocation2 + $0x80] sm:$0xff]
      %v354 = vld [vmem:[#allocation2 + $0x90] sm:$0xff]
      %v355 = vld [vmem:[#allocation2 + $0x98] sm:$0xff]
      %v356 = vld [vmem:[#allocation2 + $0xa8] sm:$0xff]
      %v357 = vld [vmem:[#allocation2 + $0xb0] sm:$0xff]
      %v358 = vld [vmem:[#allocation2 + $0xc0] sm:$0xff]
      %v359 = vld [vmem:[#allocation2 + $0xc8] sm:$0xff]
      %v360 = vld [vmem:[#allocation2 + $0xd8] sm:$0xff]
      %v361 = vld [vmem:[#allocation2 + $0xe0] sm:$0xff]
      %v362 = vld [vmem:[#allocation2 + $0xf0] sm:$0xff]
      %v363 = vld [vmem:[#allocation2 + $0xf8] sm:$0xff]
      %v364 = vld [vmem:[#allocation2 + $0x108] sm:$0xff]
      %v365 = vld [vmem:[#allocation2 + $0x110] sm:$0xff]
      %v366 = vld [vmem:[#allocation2 + $0x120] sm:$0xff]
      %v367 = vld [vmem:[#allocation2 + $0x128] sm:$0xff]
      %v368 = vld [vmem:[#allocation2 + $0x138] sm:$0xff]
      %v369 = vld [vmem:[#allocation2 + $0x140] sm:$0xff]
      %v370 = vld [vmem:[#allocation2 + $0x150] sm:$0xff]
      %v371 = vld [vmem:[#allocation2 + $0x158] sm:$0xff]
      %v372 = vld [vmem:[#allocation2 + $0x168] sm:$0xff]
      %v373 = vld [vmem:[#allocation2 + $0x170] sm:$0xff]
      %374 = vst.msk [vmem:[#allocation3] sm:$0xff] %vm231, %v342
      %375 = vst.msk [vmem:[#allocation3 + $0x8] sm:$0xff] %vm231, %v343
      %376 = vst.msk [vmem:[#allocation3 + $0x10] sm:$0xff] %vm231, %v344
      %377 = vst.msk [vmem:[#allocation3 + $0x18] sm:$0xff] %vm231, %v345
      %378 = vst.msk [vmem:[#allocation3 + $0x20] sm:$0xff] %vm231, %v346
      %379 = vst.msk [vmem:[#allocation3 + $0x28] sm:$0xff] %vm231, %v347
      %380 = vst.msk [vmem:[#allocation3 + $0x30] sm:$0xff] %vm231, %v348
      %381 = vst.msk [vmem:[#allocation3 + $0x38] sm:$0xff] %vm231, %v349
      %382 = vst.msk [vmem:[#allocation3 + $0x40] sm:$0xff] %vm231, %v350
      %383 = vst.msk [vmem:[#allocation3 + $0x48] sm:$0xff] %vm231, %v351
      %384 = vst.msk [vmem:[#allocation3 + $0x50] sm:$0xff] %vm231, %v352
      %385 = vst.msk [vmem:[#allocation3 + $0x58] sm:$0xff] %vm231, %v353
      %386 = vst.msk [vmem:[#allocation3 + $0x60] sm:$0xff] %vm231, %v354
      %387 = vst.msk [vmem:[#allocation3 + $0x68] sm:$0xff] %vm231, %v355
      %388 = vst.msk [vmem:[#allocation3 + $0x70] sm:$0xff] %vm231, %v356
      %389 = vst.msk [vmem:[#allocation3 + $0x78] sm:$0xff] %vm231, %v357
      %390 = vst.msk [vmem:[#allocation3 + $0x80] sm:$0xff] %vm231, %v358
      %391 = vst.msk [vmem:[#allocation3 + $0x88] sm:$0xff] %vm231, %v359
      %392 = vst.msk [vmem:[#allocation3 + $0x90] sm:$0xff] %vm231, %v360
      %393 = vst.msk [vmem:[#allocation3 + $0x98] sm:$0xff] %vm231, %v361
      %394 = vst.msk [vmem:[#allocation3 + $0xa0] sm:$0xff] %vm231, %v362
      %395 = vst.msk [vmem:[#allocation3 + $0xa8] sm:$0xff] %vm231, %v363
      %396 = vst.msk [vmem:[#allocation3 + $0xb0] sm:$0xff] %vm231, %v364
      %397 = vst.msk [vmem:[#allocation3 + $0xb8] sm:$0xff] %vm231, %v365
      %398 = vst.msk [vmem:[#allocation3 + $0xc0] sm:$0xff] %vm231, %v366
      %399 = vst.msk [vmem:[#allocation3 + $0xc8] sm:$0xff] %vm231, %v367
      %400 = vst.msk [vmem:[#allocation3 + $0xd0] sm:$0xff] %vm231, %v368
      %401 = vst.msk [vmem:[#allocation3 + $0xd8] sm:$0xff] %vm231, %v369
      %402 = vst.msk [vmem:[#allocation3 + $0xe0] sm:$0xff] %vm231, %v370
      %403 = vst.msk [vmem:[#allocation3 + $0xe8] sm:$0xff] %vm231, %v371
      %404 = vst.msk [vmem:[#allocation3 + $0xf0] sm:$0xff] %vm231, %v372
      %405 = vst.msk [vmem:[#allocation3 + $0xf8] sm:$0xff] %vm231, %v373
      %v406 = vld [vmem:[#allocation2 + $0x1] sm:$0xff]
      %v407 = vld [vmem:[#allocation2 + $0x9] sm:$0xff]
      %v408 = vld [vmem:[#allocation2 + $0x19] sm:$0xff]
      %v409 = vld [vmem:[#allocation2 + $0x21] sm:$0xff]
      %v410 = vld [vmem:[#allocation2 + $0x31] sm:$0xff]
      %v411 = vld [vmem:[#allocation2 + $0x39] sm:$0xff]
      %v412 = vld [vmem:[#allocation2 + $0x49] sm:$0xff]
      %v413 = vld [vmem:[#allocation2 + $0x51] sm:$0xff]
      %v414 = vld [vmem:[#allocation2 + $0x61] sm:$0xff]
      %v415 = vld [vmem:[#allocation2 + $0x69] sm:$0xff]
      %v416 = vld [vmem:[#allocation2 + $0x79] sm:$0xff]
      %v417 = vld [vmem:[#allocation2 + $0x81] sm:$0xff]
      %v418 = vld [vmem:[#allocation2 + $0x91] sm:$0xff]
      %v419 = vld [vmem:[#allocation2 + $0x99] sm:$0xff]
      %v420 = vld [vmem:[#allocation2 + $0xa9] sm:$0xff]
      %v421 = vld [vmem:[#allocation2 + $0xb1] sm:$0xff]
      %v422 = vld [vmem:[#allocation2 + $0xc1] sm:$0xff]
      %v423 = vld [vmem:[#allocation2 + $0xc9] sm:$0xff]
      %v424 = vld [vmem:[#allocation2 + $0xd9] sm:$0xff]
      %v425 = vld [vmem:[#allocation2 + $0xe1] sm:$0xff]
      %v426 = vld [vmem:[#allocation2 + $0xf1] sm:$0xff]
      %v427 = vld [vmem:[#allocation2 + $0xf9] sm:$0xff]
      %v428 = vld [vmem:[#allocation2 + $0x109] sm:$0xff]
      %v429 = vld [vmem:[#allocation2 + $0x111] sm:$0xff]
      %v430 = vld [vmem:[#allocation2 + $0x121] sm:$0xff]
      %v431 = vld [vmem:[#allocation2 + $0x129] sm:$0xff]
      %v432 = vld [vmem:[#allocation2 + $0x139] sm:$0xff]
      %v433 = vld [vmem:[#allocation2 + $0x141] sm:$0xff]
      %v434 = vld [vmem:[#allocation2 + $0x151] sm:$0xff]
      %v435 = vld [vmem:[#allocation2 + $0x159] sm:$0xff]
      %v436 = vld [vmem:[#allocation2 + $0x169] sm:$0xff]
      %v437 = vld [vmem:[#allocation2 + $0x171] sm:$0xff]
      %470 = vrot.lane.b32.xlu0 %v406, 4
      %v471 = vpop.permute.xlu0 %470
      %472 = vrot.lane.b32.xlu0 %v407, 4
      %v473 = vpop.permute.xlu0 %472
      %474 = vrot.lane.b32.xlu0 %v408, 4
      %v475 = vpop.permute.xlu0 %474
      %476 = vrot.lane.b32.xlu0 %v409, 4
      %v477 = vpop.permute.xlu0 %476
      %478 = vrot.lane.b32.xlu0 %v410, 4
      %v479 = vpop.permute.xlu0 %478
      %480 = vrot.lane.b32.xlu0 %v411, 4
      %v481 = vpop.permute.xlu0 %480
      %482 = vrot.lane.b32.xlu0 %v412, 4
      %v483 = vpop.permute.xlu0 %482
      %484 = vrot.lane.b32.xlu0 %v413, 4
      %v485 = vpop.permute.xlu0 %484
      %486 = vrot.lane.b32.xlu0 %v414, 4
      %v487 = vpop.permute.xlu0 %486
      %488 = vrot.lane.b32.xlu0 %v415, 4
      %v489 = vpop.permute.xlu0 %488
      %490 = vrot.lane.b32.xlu0 %v416, 4
      %v491 = vpop.permute.xlu0 %490
      %492 = vrot.lane.b32.xlu0 %v417, 4
      %v493 = vpop.permute.xlu0 %492
      %494 = vrot.lane.b32.xlu0 %v418, 4
      %v495 = vpop.permute.xlu0 %494
      %496 = vrot.lane.b32.xlu0 %v419, 4
      %v497 = vpop.permute.xlu0 %496
      %498 = vrot.lane.b32.xlu0 %v420, 4
      %v499 = vpop.permute.xlu0 %498
      %500 = vrot.lane.b32.xlu0 %v421, 4
      %v501 = vpop.permute.xlu0 %500
      %502 = vrot.lane.b32.xlu0 %v422, 4
      %v503 = vpop.permute.xlu0 %502
      %504 = vrot.lane.b32.xlu0 %v423, 4
      %v505 = vpop.permute.xlu0 %504
      %506 = vrot.lane.b32.xlu0 %v424, 4
      %v507 = vpop.permute.xlu0 %506
      %508 = vrot.lane.b32.xlu0 %v425, 4
      %v509 = vpop.permute.xlu0 %508
      %510 = vrot.lane.b32.xlu0 %v426, 4
      %v511 = vpop.permute.xlu0 %510
      %512 = vrot.lane.b32.xlu0 %v427, 4
      %v513 = vpop.permute.xlu0 %512
      %514 = vrot.lane.b32.xlu0 %v428, 4
      %v515 = vpop.permute.xlu0 %514
      %516 = vrot.lane.b32.xlu0 %v429, 4
      %v517 = vpop.permute.xlu0 %516
      %518 = vrot.lane.b32.xlu0 %v430, 4
      %v519 = vpop.permute.xlu0 %518
      %520 = vrot.lane.b32.xlu0 %v431, 4
      %v521 = vpop.permute.xlu0 %520
      %522 = vrot.lane.b32.xlu0 %v432, 4
      %v523 = vpop.permute.xlu0 %522
      %524 = vrot.lane.b32.xlu0 %v433, 4
      %v525 = vpop.permute.xlu0 %524
      %526 = vrot.lane.b32.xlu0 %v434, 4
      %v527 = vpop.permute.xlu0 %526
      %528 = vrot.lane.b32.xlu0 %v435, 4
      %v529 = vpop.permute.xlu0 %528
      %530 = vrot.lane.b32.xlu0 %v436, 4
      %v531 = vpop.permute.xlu0 %530
      %532 = vrot.lane.b32.xlu0 %v437, 4
      %v533 = vpop.permute.xlu0 %532
      %vm566 = vcmask 64544
      %567 = vst.msk [vmem:[#allocation3] sm:$0xff] %vm566, %v471
      %568 = vst.msk [vmem:[#allocation3 + $0x8] sm:$0xff] %vm566, %v473
      %569 = vst.msk [vmem:[#allocation3 + $0x10] sm:$0xff] %vm566, %v475
      %570 = vst.msk [vmem:[#allocation3 + $0x18] sm:$0xff] %vm566, %v477
      %571 = vst.msk [vmem:[#allocation3 + $0x20] sm:$0xff] %vm566, %v479
      %572 = vst.msk [vmem:[#allocation3 + $0x28] sm:$0xff] %vm566, %v481
      %573 = vst.msk [vmem:[#allocation3 + $0x30] sm:$0xff] %vm566, %v483
      %574 = vst.msk [vmem:[#allocation3 + $0x38] sm:$0xff] %vm566, %v485
      %575 = vst.msk [vmem:[#allocation3 + $0x40] sm:$0xff] %vm566, %v487
      %576 = vst.msk [vmem:[#allocation3 + $0x48] sm:$0xff] %vm566, %v489
      %577 = vst.msk [vmem:[#allocation3 + $0x50] sm:$0xff] %vm566, %v491
      %578 = vst.msk [vmem:[#allocation3 + $0x58] sm:$0xff] %vm566, %v493
      %579 = vst.msk [vmem:[#allocation3 + $0x60] sm:$0xff] %vm566, %v495
      %580 = vst.msk [vmem:[#allocation3 + $0x68] sm:$0xff] %vm566, %v497
      %581 = vst.msk [vmem:[#allocation3 + $0x70] sm:$0xff] %vm566, %v499
      %582 = vst.msk [vmem:[#allocation3 + $0x78] sm:$0xff] %vm566, %v501
      %583 = vst.msk [vmem:[#allocation3 + $0x80] sm:$0xff] %vm566, %v503
      %584 = vst.msk [vmem:[#allocation3 + $0x88] sm:$0xff] %vm566, %v505
      %585 = vst.msk [vmem:[#allocation3 + $0x90] sm:$0xff] %vm566, %v507
      %586 = vst.msk [vmem:[#allocation3 + $0x98] sm:$0xff] %vm566, %v509
      %587 = vst.msk [vmem:[#allocation3 + $0xa0] sm:$0xff] %vm566, %v511
      %588 = vst.msk [vmem:[#allocation3 + $0xa8] sm:$0xff] %vm566, %v513
      %589 = vst.msk [vmem:[#allocation3 + $0xb0] sm:$0xff] %vm566, %v515
      %590 = vst.msk [vmem:[#allocation3 + $0xb8] sm:$0xff] %vm566, %v517
      %591 = vst.msk [vmem:[#allocation3 + $0xc0] sm:$0xff] %vm566, %v519
      %592 = vst.msk [vmem:[#allocation3 + $0xc8] sm:$0xff] %vm566, %v521
      %593 = vst.msk [vmem:[#allocation3 + $0xd0] sm:$0xff] %vm566, %v523
      %594 = vst.msk [vmem:[#allocation3 + $0xd8] sm:$0xff] %vm566, %v525
      %595 = vst.msk [vmem:[#allocation3 + $0xe0] sm:$0xff] %vm566, %v527
      %596 = vst.msk [vmem:[#allocation3 + $0xe8] sm:$0xff] %vm566, %v529
      %597 = vst.msk [vmem:[#allocation3 + $0xf0] sm:$0xff] %vm566, %v531
      %598 = vst.msk [vmem:[#allocation3 + $0xf8] sm:$0xff] %vm566, %v533
      %v599 = vld [vmem:[#allocation2 + $0x2] sm:$0xff]
      %v600 = vld [vmem:[#allocation2 + $0xa] sm:$0xff]
      %v601 = vld [vmem:[#allocation2 + $0x1a] sm:$0xff]
      %v602 = vld [vmem:[#allocation2 + $0x22] sm:$0xff]
      %v603 = vld [vmem:[#allocation2 + $0x32] sm:$0xff]
      %v604 = vld [vmem:[#allocation2 + $0x3a] sm:$0xff]
      %v605 = vld [vmem:[#allocation2 + $0x4a] sm:$0xff]
      %v606 = vld [vmem:[#allocation2 + $0x52] sm:$0xff]
      %v607 = vld [vmem:[#allocation2 + $0x62] sm:$0xff]
      %v608 = vld [vmem:[#allocation2 + $0x6a] sm:$0xff]
      %v609 = vld [vmem:[#allocation2 + $0x7a] sm:$0xff]
      %v610 = vld [vmem:[#allocation2 + $0x82] sm:$0xff]
      %v611 = vld [vmem:[#allocation2 + $0x92] sm:$0xff]
      %v612 = vld [vmem:[#allocation2 + $0x9a] sm:$0xff]
      %v613 = vld [vmem:[#allocation2 + $0xaa] sm:$0xff]
      %v614 = vld [vmem:[#allocation2 + $0xb2] sm:$0xff]
      %v615 = vld [vmem:[#allocation2 + $0xc2] sm:$0xff]
      %v616 = vld [vmem:[#allocation2 + $0xca] sm:$0xff]
      %v617 = vld [vmem:[#allocation2 + $0xda] sm:$0xff]
      %v618 = vld [vmem:[#allocation2 + $0xe2] sm:$0xff]
      %v619 = vld [vmem:[#allocation2 + $0xf2] sm:$0xff]
      %v620 = vld [vmem:[#allocation2 + $0xfa] sm:$0xff]
      %v621 = vld [vmem:[#allocation2 + $0x10a] sm:$0xff]
      %v622 = vld [vmem:[#allocation2 + $0x112] sm:$0xff]
      %v623 = vld [vmem:[#allocation2 + $0x122] sm:$0xff]
      %v624 = vld [vmem:[#allocation2 + $0x12a] sm:$0xff]
      %v625 = vld [vmem:[#allocation2 + $0x13a] sm:$0xff]
      %v626 = vld [vmem:[#allocation2 + $0x142] sm:$0xff]
      %v627 = vld [vmem:[#allocation2 + $0x152] sm:$0xff]
      %v628 = vld [vmem:[#allocation2 + $0x15a] sm:$0xff]
      %v629 = vld [vmem:[#allocation2 + $0x16a] sm:$0xff]
      %v630 = vld [vmem:[#allocation2 + $0x172] sm:$0xff]
      %663 = vrot.lane.b32.xlu0 %v599, 8
      %v664 = vpop.permute.xlu0 %663
      %665 = vrot.lane.b32.xlu0 %v600, 8
      %v666 = vpop.permute.xlu0 %665
      %667 = vrot.lane.b32.xlu0 %v601, 8
      %v668 = vpop.permute.xlu0 %667
      %669 = vrot.lane.b32.xlu0 %v602, 8
      %v670 = vpop.permute.xlu0 %669
      %671 = vrot.lane.b32.xlu0 %v603, 8
      %v672 = vpop.permute.xlu0 %671
      %673 = vrot.lane.b32.xlu0 %v604, 8
      %v674 = vpop.permute.xlu0 %673
      %675 = vrot.lane.b32.xlu0 %v605, 8
      %v676 = vpop.permute.xlu0 %675
      %677 = vrot.lane.b32.xlu0 %v606, 8
      %v678 = vpop.permute.xlu0 %677
      %679 = vrot.lane.b32.xlu0 %v607, 8
      %v680 = vpop.permute.xlu0 %679
      %681 = vrot.lane.b32.xlu0 %v608, 8
      %v682 = vpop.permute.xlu0 %681
      %683 = vrot.lane.b32.xlu0 %v609, 8
      %v684 = vpop.permute.xlu0 %683
      %685 = vrot.lane.b32.xlu0 %v610, 8
      %v686 = vpop.permute.xlu0 %685
      %687 = vrot.lane.b32.xlu0 %v611, 8
      %v688 = vpop.permute.xlu0 %687
      %689 = vrot.lane.b32.xlu0 %v612, 8
      %v690 = vpop.permute.xlu0 %689
      %691 = vrot.lane.b32.xlu0 %v613, 8
      %v692 = vpop.permute.xlu0 %691
      %693 = vrot.lane.b32.xlu0 %v614, 8
      %v694 = vpop.permute.xlu0 %693
      %695 = vrot.lane.b32.xlu0 %v615, 8
      %v696 = vpop.permute.xlu0 %695
      %697 = vrot.lane.b32.xlu0 %v616, 8
      %v698 = vpop.permute.xlu0 %697
      %699 = vrot.lane.b32.xlu0 %v617, 8
      %v700 = vpop.permute.xlu0 %699
      %701 = vrot.lane.b32.xlu0 %v618, 8
      %v702 = vpop.permute.xlu0 %701
      %703 = vrot.lane.b32.xlu0 %v619, 8
      %v704 = vpop.permute.xlu0 %703
      %705 = vrot.lane.b32.xlu0 %v620, 8
      %v706 = vpop.permute.xlu0 %705
      %707 = vrot.lane.b32.xlu0 %v621, 8
      %v708 = vpop.permute.xlu0 %707
      %709 = vrot.lane.b32.xlu0 %v622, 8
      %v710 = vpop.permute.xlu0 %709
      %711 = vrot.lane.b32.xlu0 %v623, 8
      %v712 = vpop.permute.xlu0 %711
      %713 = vrot.lane.b32.xlu0 %v624, 8
      %v714 = vpop.permute.xlu0 %713
      %715 = vrot.lane.b32.xlu0 %v625, 8
      %v716 = vpop.permute.xlu0 %715
      %717 = vrot.lane.b32.xlu0 %v626, 8
      %v718 = vpop.permute.xlu0 %717
      %719 = vrot.lane.b32.xlu0 %v627, 8
      %v720 = vpop.permute.xlu0 %719
      %721 = vrot.lane.b32.xlu0 %v628, 8
      %v722 = vpop.permute.xlu0 %721
      %723 = vrot.lane.b32.xlu0 %v629, 8
      %v724 = vpop.permute.xlu0 %723
      %725 = vrot.lane.b32.xlu0 %v630, 8
      %v726 = vpop.permute.xlu0 %725
      %vm759 = vcmask 97344
      %760 = vst.msk [vmem:[#allocation3] sm:$0xff] %vm759, %v664
      %761 = vst.msk [vmem:[#allocation3 + $0x8] sm:$0xff] %vm759, %v666
      %762 = vst.msk [vmem:[#allocation3 + $0x10] sm:$0xff] %vm759, %v668
      %763 = vst.msk [vmem:[#allocation3 + $0x18] sm:$0xff] %vm759, %v670
      %764 = vst.msk [vmem:[#allocation3 + $0x20] sm:$0xff] %vm759, %v672
      %765 = vst.msk [vmem:[#allocation3 + $0x28] sm:$0xff] %vm759, %v674
      %766 = vst.msk [vmem:[#allocation3 + $0x30] sm:$0xff] %vm759, %v676
      %767 = vst.msk [vmem:[#allocation3 + $0x38] sm:$0xff] %vm759, %v678
      %768 = vst.msk [vmem:[#allocation3 + $0x40] sm:$0xff] %vm759, %v680
      %769 = vst.msk [vmem:[#allocation3 + $0x48] sm:$0xff] %vm759, %v682
      %770 = vst.msk [vmem:[#allocation3 + $0x50] sm:$0xff] %vm759, %v684
      %771 = vst.msk [vmem:[#allocation3 + $0x58] sm:$0xff] %vm759, %v686
      %772 = vst.msk [vmem:[#allocation3 + $0x60] sm:$0xff] %vm759, %v688
      %773 = vst.msk [vmem:[#allocation3 + $0x68] sm:$0xff] %vm759, %v690
      %774 = vst.msk [vmem:[#allocation3 + $0x70] sm:$0xff] %vm759, %v692
      %775 = vst.msk [vmem:[#allocation3 + $0x78] sm:$0xff] %vm759, %v694
      %776 = vst.msk [vmem:[#allocation3 + $0x80] sm:$0xff] %vm759, %v696
      %777 = vst.msk [vmem:[#allocation3 + $0x88] sm:$0xff] %vm759, %v698
      %778 = vst.msk [vmem:[#allocation3 + $0x90] sm:$0xff] %vm759, %v700
      %779 = vst.msk [vmem:[#allocation3 + $0x98] sm:$0xff] %vm759, %v702
      %780 = vst.msk [vmem:[#allocation3 + $0xa0] sm:$0xff] %vm759, %v704
      %781 = vst.msk [vmem:[#allocation3 + $0xa8] sm:$0xff] %vm759, %v706
      %782 = vst.msk [vmem:[#allocation3 + $0xb0] sm:$0xff] %vm759, %v708
      %783 = vst.msk [vmem:[#allocation3 + $0xb8] sm:$0xff] %vm759, %v710
      %784 = vst.msk [vmem:[#allocation3 + $0xc0] sm:$0xff] %vm759, %v712
      %785 = vst.msk [vmem:[#allocation3 + $0xc8] sm:$0xff] %vm759, %v714
      %786 = vst.msk [vmem:[#allocation3 + $0xd0] sm:$0xff] %vm759, %v716
      %787 = vst.msk [vmem:[#allocation3 + $0xd8] sm:$0xff] %vm759, %v718
      %788 = vst.msk [vmem:[#allocation3 + $0xe0] sm:$0xff] %vm759, %v720
      %789 = vst.msk [vmem:[#allocation3 + $0xe8] sm:$0xff] %vm759, %v722
      %790 = vst.msk [vmem:[#allocation3 + $0xf0] sm:$0xff] %vm759, %v724
      %791 = vst.msk [vmem:[#allocation3 + $0xf8] sm:$0xff] %vm759, %v726
      %v792 = vld [vmem:[%s230] sm:$0xff]
      %v793 = vld [vmem:[%s230 + $0x8] sm:$0xff]
      %v794 = vld [vmem:[%s230 + $0x18] sm:$0xff]
      %v795 = vld [vmem:[%s230 + $0x20] sm:$0xff]
      %v796 = vld [vmem:[%s230 + $0x30] sm:$0xff]
      %v797 = vld [vmem:[%s230 + $0x38] sm:$0xff]
      %v798 = vld [vmem:[%s230 + $0x48] sm:$0xff]
      %v799 = vld [vmem:[%s230 + $0x50] sm:$0xff]
      %v800 = vld [vmem:[%s230 + $0x60] sm:$0xff]
      %v801 = vld [vmem:[%s230 + $0x68] sm:$0xff]
      %v802 = vld [vmem:[%s230 + $0x78] sm:$0xff]
      %v803 = vld [vmem:[%s230 + $0x80] sm:$0xff]
      %v804 = vld [vmem:[%s230 + $0x90] sm:$0xff]
      %v805 = vld [vmem:[%s230 + $0x98] sm:$0xff]
      %v806 = vld [vmem:[%s230 + $0xa8] sm:$0xff]
      %v807 = vld [vmem:[%s230 + $0xb0] sm:$0xff]
      %v808 = vld [vmem:[%s230 + $0xc0] sm:$0xff]
      %v809 = vld [vmem:[%s230 + $0xc8] sm:$0xff]
      %v810 = vld [vmem:[%s230 + $0xd8] sm:$0xff]
      %v811 = vld [vmem:[%s230 + $0xe0] sm:$0xff]
      %v812 = vld [vmem:[%s230 + $0xf0] sm:$0xff]
      %v813 = vld [vmem:[%s230 + $0xf8] sm:$0xff]
      %v814 = vld [vmem:[%s230 + $0x108] sm:$0xff]
      %v815 = vld [vmem:[%s230 + $0x110] sm:$0xff]
      %v816 = vld [vmem:[%s230 + $0x120] sm:$0xff]
      %v817 = vld [vmem:[%s230 + $0x128] sm:$0xff]
      %v818 = vld [vmem:[%s230 + $0x138] sm:$0xff]
      %v819 = vld [vmem:[%s230 + $0x140] sm:$0xff]
      %v820 = vld [vmem:[%s230 + $0x150] sm:$0xff]
      %v821 = vld [vmem:[%s230 + $0x158] sm:$0xff]
      %v822 = vld [vmem:[%s230 + $0x168] sm:$0xff]
      %v823 = vld [vmem:[%s230 + $0x170] sm:$0xff]
      %856 = vrot.lane.b32.xlu0 %v792, 12
      %v857 = vpop.permute.xlu0 %856
      %858 = vrot.lane.b32.xlu0 %v793, 12
      %v859 = vpop.permute.xlu0 %858
      %860 = vrot.lane.b32.xlu0 %v794, 12
      %v861 = vpop.permute.xlu0 %860
      %862 = vrot.lane.b32.xlu0 %v795, 12
      %v863 = vpop.permute.xlu0 %862
      %864 = vrot.lane.b32.xlu0 %v796, 12
      %v865 = vpop.permute.xlu0 %864
      %866 = vrot.lane.b32.xlu0 %v797, 12
      %v867 = vpop.permute.xlu0 %866
      %868 = vrot.lane.b32.xlu0 %v798, 12
      %v869 = vpop.permute.xlu0 %868
      %870 = vrot.lane.b32.xlu0 %v799, 12
      %v871 = vpop.permute.xlu0 %870
      %872 = vrot.lane.b32.xlu0 %v800, 12
      %v873 = vpop.permute.xlu0 %872
      %874 = vrot.lane.b32.xlu0 %v801, 12
      %v875 = vpop.permute.xlu0 %874
      %876 = vrot.lane.b32.xlu0 %v802, 12
      %v877 = vpop.permute.xlu0 %876
      %878 = vrot.lane.b32.xlu0 %v803, 12
      %v879 = vpop.permute.xlu0 %878
      %880 = vrot.lane.b32.xlu0 %v804, 12
      %v881 = vpop.permute.xlu0 %880
      %882 = vrot.lane.b32.xlu0 %v805, 12
      %v883 = vpop.permute.xlu0 %882
      %884 = vrot.lane.b32.xlu0 %v806, 12
      %v885 = vpop.permute.xlu0 %884
      %886 = vrot.lane.b32.xlu0 %v807, 12
      %v887 = vpop.permute.xlu0 %886
      %888 = vrot.lane.b32.xlu0 %v808, 12
      %v889 = vpop.permute.xlu0 %888
      %890 = vrot.lane.b32.xlu0 %v809, 12
      %v891 = vpop.permute.xlu0 %890
      %892 = vrot.lane.b32.xlu0 %v810, 12
      %v893 = vpop.permute.xlu0 %892
      %894 = vrot.lane.b32.xlu0 %v811, 12
      %v895 = vpop.permute.xlu0 %894
      %896 = vrot.lane.b32.xlu0 %v812, 12
      %v897 = vpop.permute.xlu0 %896
      %898 = vrot.lane.b32.xlu0 %v813, 12
      %v899 = vpop.permute.xlu0 %898
      %900 = vrot.lane.b32.xlu0 %v814, 12
      %v901 = vpop.permute.xlu0 %900
      %902 = vrot.lane.b32.xlu0 %v815, 12
      %v903 = vpop.permute.xlu0 %902
      %904 = vrot.lane.b32.xlu0 %v816, 12
      %v905 = vpop.permute.xlu0 %904
      %906 = vrot.lane.b32.xlu0 %v817, 12
      %v907 = vpop.permute.xlu0 %906
      %908 = vrot.lane.b32.xlu0 %v818, 12
      %v909 = vpop.permute.xlu0 %908
      %910 = vrot.lane.b32.xlu0 %v819, 12
      %v911 = vpop.permute.xlu0 %910
      %912 = vrot.lane.b32.xlu0 %v820, 12
      %v913 = vpop.permute.xlu0 %912
      %914 = vrot.lane.b32.xlu0 %v821, 12
      %v915 = vpop.permute.xlu0 %914
      %916 = vrot.lane.b32.xlu0 %v822, 12
      %v917 = vpop.permute.xlu0 %916
      %918 = vrot.lane.b32.xlu0 %v823, 12
      %v919 = vpop.permute.xlu0 %918
      %vm952 = vcmask 130144
      %953 = vst.msk [vmem:[#allocation3] sm:$0xff] %vm952, %v857
      %954 = vst.msk [vmem:[#allocation3 + $0x8] sm:$0xff] %vm952, %v859
      %955 = vst.msk [vmem:[#allocation3 + $0x10] sm:$0xff] %vm952, %v861
      %956 = vst.msk [vmem:[#allocation3 + $0x18] sm:$0xff] %vm952, %v863
      %957 = vst.msk [vmem:[#allocation3 + $0x20] sm:$0xff] %vm952, %v865
      %958 = vst.msk [vmem:[#allocation3 + $0x28] sm:$0xff] %vm952, %v867
      %959 = vst.msk [vmem:[#allocation3 + $0x30] sm:$0xff] %vm952, %v869
      %960 = vst.msk [vmem:[#allocation3 + $0x38] sm:$0xff] %vm952, %v871
      %961 = vst.msk [vmem:[#allocation3 + $0x40] sm:$0xff] %vm952, %v873
      %962 = vst.msk [vmem:[#allocation3 + $0x48] sm:$0xff] %vm952, %v875
      %963 = vst.msk [vmem:[#allocation3 + $0x50] sm:$0xff] %vm952, %v877
      %964 = vst.msk [vmem:[#allocation3 + $0x58] sm:$0xff] %vm952, %v879
      %965 = vst.msk [vmem:[#allocation3 + $0x60] sm:$0xff] %vm952, %v881
      %966 = vst.msk [vmem:[#allocation3 + $0x68] sm:$0xff] %vm952, %v883
      %967 = vst.msk [vmem:[#allocation3 + $0x70] sm:$0xff] %vm952, %v885
      %968 = vst.msk [vmem:[#allocation3 + $0x78] sm:$0xff] %vm952, %v887
      %969 = vst.msk [vmem:[#allocation3 + $0x80] sm:$0xff] %vm952, %v889
      %970 = vst.msk [vmem:[#allocation3 + $0x88] sm:$0xff] %vm952, %v891
      %971 = vst.msk [vmem:[#allocation3 + $0x90] sm:$0xff] %vm952, %v893
      %972 = vst.msk [vmem:[#allocation3 + $0x98] sm:$0xff] %vm952, %v895
      %973 = vst.msk [vmem:[#allocation3 + $0xa0] sm:$0xff] %vm952, %v897
      %974 = vst.msk [vmem:[#allocation3 + $0xa8] sm:$0xff] %vm952, %v899
      %975 = vst.msk [vmem:[#allocation3 + $0xb0] sm:$0xff] %vm952, %v901
      %976 = vst.msk [vmem:[#allocation3 + $0xb8] sm:$0xff] %vm952, %v903
      %977 = vst.msk [vmem:[#allocation3 + $0xc0] sm:$0xff] %vm952, %v905
      %978 = vst.msk [vmem:[#allocation3 + $0xc8] sm:$0xff] %vm952, %v907
      %979 = vst.msk [vmem:[#allocation3 + $0xd0] sm:$0xff] %vm952, %v909
      %980 = vst.msk [vmem:[#allocation3 + $0xd8] sm:$0xff] %vm952, %v911
      %981 = vst.msk [vmem:[#allocation3 + $0xe0] sm:$0xff] %vm952, %v913
      %982 = vst.msk [vmem:[#allocation3 + $0xe8] sm:$0xff] %vm952, %v915
      %983 = vst.msk [vmem:[#allocation3 + $0xf0] sm:$0xff] %vm952, %v917
      %984 = vst.msk [vmem:[#allocation3 + $0xf8] sm:$0xff] %vm952, %v919
      %v985 = vld [vmem:[%s230 + $0x1] sm:$0xff]
      %v986 = vld [vmem:[%s230 + $0x9] sm:$0xff]
      %v987 = vld [vmem:[%s230 + $0x19] sm:$0xff]
      %v988 = vld [vmem:[%s230 + $0x21] sm:$0xff]
      %v989 = vld [vmem:[%s230 + $0x31] sm:$0xff]
      %v990 = vld [vmem:[%s230 + $0x39] sm:$0xff]
      %v991 = vld [vmem:[%s230 + $0x49] sm:$0xff]
      %v992 = vld [vmem:[%s230 + $0x51] sm:$0xff]
      %v993 = vld [vmem:[%s230 + $0x61] sm:$0xff]
      %v994 = vld [vmem:[%s230 + $0x69] sm:$0xff]
      %v995 = vld [vmem:[%s230 + $0x79] sm:$0xff]
      %v996 = vld [vmem:[%s230 + $0x81] sm:$0xff]
      %v997 = vld [vmem:[%s230 + $0x91] sm:$0xff]
      %v998 = vld [vmem:[%s230 + $0x99] sm:$0xff]
      %v999 = vld [vmem:[%s230 + $0xa9] sm:$0xff]
      %v1000 = vld [vmem:[%s230 + $0xb1] sm:$0xff]
      %v1001 = vld [vmem:[%s230 + $0xc1] sm:$0xff]
      %v1002 = vld [vmem:[%s230 + $0xc9] sm:$0xff]
      %v1003 = vld [vmem:[%s230 + $0xd9] sm:$0xff]
      %v1004 = vld [vmem:[%s230 + $0xe1] sm:$0xff]
      %v1005 = vld [vmem:[%s230 + $0xf1] sm:$0xff]
      %v1006 = vld [vmem:[%s230 + $0xf9] sm:$0xff]
      %v1007 = vld [vmem:[%s230 + $0x109] sm:$0xff]
      %v1008 = vld [vmem:[%s230 + $0x111] sm:$0xff]
      %v1009 = vld [vmem:[%s230 + $0x121] sm:$0xff]
      %v1010 = vld [vmem:[%s230 + $0x129] sm:$0xff]
      %v1011 = vld [vmem:[%s230 + $0x139] sm:$0xff]
      %v1012 = vld [vmem:[%s230 + $0x141] sm:$0xff]
      %v1013 = vld [vmem:[%s230 + $0x151] sm:$0xff]
      %v1014 = vld [vmem:[%s230 + $0x159] sm:$0xff]
      %v1015 = vld [vmem:[%s230 + $0x169] sm:$0xff]
      %v1016 = vld [vmem:[%s230 + $0x171] sm:$0xff]
      %1049 = vrot.lane.b32.xlu0 %v985, 16
      %v1050 = vpop.permute.xlu0 %1049
      %1051 = vrot.lane.b32.xlu0 %v986, 16
      %v1052 = vpop.permute.xlu0 %1051
      %1053 = vrot.lane.b32.xlu0 %v987, 16
      %v1054 = vpop.permute.xlu0 %1053
      %1055 = vrot.lane.b32.xlu0 %v988, 16
      %v1056 = vpop.permute.xlu0 %1055
      %1057 = vrot.lane.b32.xlu0 %v989, 16
      %v1058 = vpop.permute.xlu0 %1057
      %1059 = vrot.lane.b32.xlu0 %v990, 16
      %v1060 = vpop.permute.xlu0 %1059
      %1061 = vrot.lane.b32.xlu0 %v991, 16
      %v1062 = vpop.permute.xlu0 %1061
      %1063 = vrot.lane.b32.xlu0 %v992, 16
      %v1064 = vpop.permute.xlu0 %1063
      %1065 = vrot.lane.b32.xlu0 %v993, 16
      %v1066 = vpop.permute.xlu0 %1065
      %1067 = vrot.lane.b32.xlu0 %v994, 16
      %v1068 = vpop.permute.xlu0 %1067
      %1069 = vrot.lane.b32.xlu0 %v995, 16
      %v1070 = vpop.permute.xlu0 %1069
      %1071 = vrot.lane.b32.xlu0 %v996, 16
      %v1072 = vpop.permute.xlu0 %1071
      %1073 = vrot.lane.b32.xlu0 %v997, 16
      %v1074 = vpop.permute.xlu0 %1073
      %1075 = vrot.lane.b32.xlu0 %v998, 16
      %v1076 = vpop.permute.xlu0 %1075
      %1077 = vrot.lane.b32.xlu0 %v999, 16
      %v1078 = vpop.permute.xlu0 %1077
      %1079 = vrot.lane.b32.xlu0 %v1000, 16
      %v1080 = vpop.permute.xlu0 %1079
      %1081 = vrot.lane.b32.xlu0 %v1001, 16
      %v1082 = vpop.permute.xlu0 %1081
      %1083 = vrot.lane.b32.xlu0 %v1002, 16
      %v1084 = vpop.permute.xlu0 %1083
      %1085 = vrot.lane.b32.xlu0 %v1003, 16
      %v1086 = vpop.permute.xlu0 %1085
      %1087 = vrot.lane.b32.xlu0 %v1004, 16
      %v1088 = vpop.permute.xlu0 %1087
      %1089 = vrot.lane.b32.xlu0 %v1005, 16
      %v1090 = vpop.permute.xlu0 %1089
      %1091 = vrot.lane.b32.xlu0 %v1006, 16
      %v1092 = vpop.permute.xlu0 %1091
      %1093 = vrot.lane.b32.xlu0 %v1007, 16
      %v1094 = vpop.permute.xlu0 %1093
      %1095 = vrot.lane.b32.xlu0 %v1008, 16
      %v1096 = vpop.permute.xlu0 %1095
      %1097 = vrot.lane.b32.xlu0 %v1009, 16
      %v1098 = vpop.permute.xlu0 %1097
      %1099 = vrot.lane.b32.xlu0 %v1010, 16
      %v1100 = vpop.permute.xlu0 %1099
      %1101 = vrot.lane.b32.xlu0 %v1011, 16
      %v1102 = vpop.permute.xlu0 %1101
      %1103 = vrot.lane.b32.xlu0 %v1012, 16
      %v1104 = vpop.permute.xlu0 %1103
      %1105 = vrot.lane.b32.xlu0 %v1013, 16
      %v1106 = vpop.permute.xlu0 %1105
      %1107 = vrot.lane.b32.xlu0 %v1014, 16
      %v1108 = vpop.permute.xlu0 %1107
      %1109 = vrot.lane.b32.xlu0 %v1015, 16
      %v1110 = vpop.permute.xlu0 %1109
      %1111 = vrot.lane.b32.xlu0 %v1016, 16
      %v1112 = vpop.permute.xlu0 %1111
      %vm1145 = vcmask 162944
      %1146 = vst.msk [vmem:[#allocation3] sm:$0xff] %vm1145, %v1050
      %1147 = vst.msk [vmem:[#allocation3 + $0x8] sm:$0xff] %vm1145, %v1052
      %1148 = vst.msk [vmem:[#allocation3 + $0x10] sm:$0xff] %vm1145, %v1054
      %1149 = vst.msk [vmem:[#allocation3 + $0x18] sm:$0xff] %vm1145, %v1056
      %1150 = vst.msk [vmem:[#allocation3 + $0x20] sm:$0xff] %vm1145, %v1058
      %1151 = vst.msk [vmem:[#allocation3 + $0x28] sm:$0xff] %vm1145, %v1060
      %1152 = vst.msk [vmem:[#allocation3 + $0x30] sm:$0xff] %vm1145, %v1062
      %1153 = vst.msk [vmem:[#allocation3 + $0x38] sm:$0xff] %vm1145, %v1064
      %1154 = vst.msk [vmem:[#allocation3 + $0x40] sm:$0xff] %vm1145, %v1066
      %1155 = vst.msk [vmem:[#allocation3 + $0x48] sm:$0xff] %vm1145, %v1068
      %1156 = vst.msk [vmem:[#allocation3 + $0x50] sm:$0xff] %vm1145, %v1070
      %1157 = vst.msk [vmem:[#allocation3 + $0x58] sm:$0xff] %vm1145, %v1072
      %1158 = vst.msk [vmem:[#allocation3 + $0x60] sm:$0xff] %vm1145, %v1074
      %1159 = vst.msk [vmem:[#allocation3 + $0x68] sm:$0xff] %vm1145, %v1076
      %1160 = vst.msk [vmem:[#allocation3 + $0x70] sm:$0xff] %vm1145, %v1078
      %1161 = vst.msk [vmem:[#allocation3 + $0x78] sm:$0xff] %vm1145, %v1080
      %1162 = vst.msk [vmem:[#allocation3 + $0x80] sm:$0xff] %vm1145, %v1082
      %1163 = vst.msk [vmem:[#allocation3 + $0x88] sm:$0xff] %vm1145, %v1084
      %1164 = vst.msk [vmem:[#allocation3 + $0x90] sm:$0xff] %vm1145, %v1086
      %1165 = vst.msk [vmem:[#allocation3 + $0x98] sm:$0xff] %vm1145, %v1088
      %1166 = vst.msk [vmem:[#allocation3 + $0xa0] sm:$0xff] %vm1145, %v1090
      %1167 = vst.msk [vmem:[#allocation3 + $0xa8] sm:$0xff] %vm1145, %v1092
      %1168 = vst.msk [vmem:[#allocation3 + $0xb0] sm:$0xff] %vm1145, %v1094
      %1169 = vst.msk [vmem:[#allocation3 + $0xb8] sm:$0xff] %vm1145, %v1096
      %1170 = vst.msk [vmem:[#allocation3 + $0xc0] sm:$0xff] %vm1145, %v1098
      %1171 = vst.msk [vmem:[#allocation3 + $0xc8] sm:$0xff] %vm1145, %v1100
      %1172 = vst.msk [vmem:[#allocation3 + $0xd0] sm:$0xff] %vm1145, %v1102
      %1173 = vst.msk [vmem:[#allocation3 + $0xd8] sm:$0xff] %vm1145, %v1104
      %1174 = vst.msk [vmem:[#allocation3 + $0xe0] sm:$0xff] %vm1145, %v1106
      %1175 = vst.msk [vmem:[#allocation3 + $0xe8] sm:$0xff] %vm1145, %v1108
      %1176 = vst.msk [vmem:[#allocation3 + $0xf0] sm:$0xff] %vm1145, %v1110
      %1177 = vst.msk [vmem:[#allocation3 + $0xf8] sm:$0xff] %vm1145, %v1112
      %v1178 = vld [vmem:[%s230 + $0x2] sm:$0xff]
      %v1179 = vld [vmem:[%s230 + $0xa] sm:$0xff]
      %v1180 = vld [vmem:[%s230 + $0x1a] sm:$0xff]
      %v1181 = vld [vmem:[%s230 + $0x22] sm:$0xff]
      %v1182 = vld [vmem:[%s230 + $0x32] sm:$0xff]
      %v1183 = vld [vmem:[%s230 + $0x3a] sm:$0xff]
      %v1184 = vld [vmem:[%s230 + $0x4a] sm:$0xff]
      %v1185 = vld [vmem:[%s230 + $0x52] sm:$0xff]
      %v1186 = vld [vmem:[%s230 + $0x62] sm:$0xff]
      %v1187 = vld [vmem:[%s230 + $0x6a] sm:$0xff]
      %v1188 = vld [vmem:[%s230 + $0x7a] sm:$0xff]
      %v1189 = vld [vmem:[%s230 + $0x82] sm:$0xff]
      %v1190 = vld [vmem:[%s230 + $0x92] sm:$0xff]
      %v1191 = vld [vmem:[%s230 + $0x9a] sm:$0xff]
      %v1192 = vld [vmem:[%s230 + $0xaa] sm:$0xff]
      %v1193 = vld [vmem:[%s230 + $0xb2] sm:$0xff]
      %v1194 = vld [vmem:[%s230 + $0xc2] sm:$0xff]
      %v1195 = vld [vmem:[%s230 + $0xca] sm:$0xff]
      %v1196 = vld [vmem:[%s230 + $0xda] sm:$0xff]
      %v1197 = vld [vmem:[%s230 + $0xe2] sm:$0xff]
      %v1198 = vld [vmem:[%s230 + $0xf2] sm:$0xff]
      %v1199 = vld [vmem:[%s230 + $0xfa] sm:$0xff]
      %v1200 = vld [vmem:[%s230 + $0x10a] sm:$0xff]
      %v1201 = vld [vmem:[%s230 + $0x112] sm:$0xff]
      %v1202 = vld [vmem:[%s230 + $0x122] sm:$0xff]
      %v1203 = vld [vmem:[%s230 + $0x12a] sm:$0xff]
      %v1204 = vld [vmem:[%s230 + $0x13a] sm:$0xff]
      %v1205 = vld [vmem:[%s230 + $0x142] sm:$0xff]
      %v1206 = vld [vmem:[%s230 + $0x152] sm:$0xff]
      %v1207 = vld [vmem:[%s230 + $0x15a] sm:$0xff]
      %v1208 = vld [vmem:[%s230 + $0x16a] sm:$0xff]
      %v1209 = vld [vmem:[%s230 + $0x172] sm:$0xff]
      %1242 = vrot.lane.b32.xlu0 %v1178, 20
      %v1243 = vpop.permute.xlu0 %1242
      %1244 = vrot.lane.b32.xlu0 %v1179, 20
      %v1245 = vpop.permute.xlu0 %1244
      %1246 = vrot.lane.b32.xlu0 %v1180, 20
      %v1247 = vpop.permute.xlu0 %1246
      %1248 = vrot.lane.b32.xlu0 %v1181, 20
      %v1249 = vpop.permute.xlu0 %1248
      %1250 = vrot.lane.b32.xlu0 %v1182, 20
      %v1251 = vpop.permute.xlu0 %1250
      %1252 = vrot.lane.b32.xlu0 %v1183, 20
      %v1253 = vpop.permute.xlu0 %1252
      %1254 = vrot.lane.b32.xlu0 %v1184, 20
      %v1255 = vpop.permute.xlu0 %1254
      %1256 = vrot.lane.b32.xlu0 %v1185, 20
      %v1257 = vpop.permute.xlu0 %1256
      %1258 = vrot.lane.b32.xlu0 %v1186, 20
      %v1259 = vpop.permute.xlu0 %1258
      %1260 = vrot.lane.b32.xlu0 %v1187, 20
      %v1261 = vpop.permute.xlu0 %1260
      %1262 = vrot.lane.b32.xlu0 %v1188, 20
      %v1263 = vpop.permute.xlu0 %1262
      %1264 = vrot.lane.b32.xlu0 %v1189, 20
      %v1265 = vpop.permute.xlu0 %1264
      %1266 = vrot.lane.b32.xlu0 %v1190, 20
      %v1267 = vpop.permute.xlu0 %1266
      %1268 = vrot.lane.b32.xlu0 %v1191, 20
      %v1269 = vpop.permute.xlu0 %1268
      %1270 = vrot.lane.b32.xlu0 %v1192, 20
      %v1271 = vpop.permute.xlu0 %1270
      %1272 = vrot.lane.b32.xlu0 %v1193, 20
      %v1273 = vpop.permute.xlu0 %1272
      %1274 = vrot.lane.b32.xlu0 %v1194, 20
      %v1275 = vpop.permute.xlu0 %1274
      %1276 = vrot.lane.b32.xlu0 %v1195, 20
      %v1277 = vpop.permute.xlu0 %1276
      %1278 = vrot.lane.b32.xlu0 %v1196, 20
      %v1279 = vpop.permute.xlu0 %1278
      %1280 = vrot.lane.b32.xlu0 %v1197, 20
      %v1281 = vpop.permute.xlu0 %1280
      %1282 = vrot.lane.b32.xlu0 %v1198, 20
      %v1283 = vpop.permute.xlu0 %1282
      %1284 = vrot.lane.b32.xlu0 %v1199, 20
      %v1285 = vpop.permute.xlu0 %1284
      %1286 = vrot.lane.b32.xlu0 %v1200, 20
      %v1287 = vpop.permute.xlu0 %1286
      %1288 = vrot.lane.b32.xlu0 %v1201, 20
      %v1289 = vpop.permute.xlu0 %1288
      %1290 = vrot.lane.b32.xlu0 %v1202, 20
      %v1291 = vpop.permute.xlu0 %1290
      %1292 = vrot.lane.b32.xlu0 %v1203, 20
      %v1293 = vpop.permute.xlu0 %1292
      %1294 = vrot.lane.b32.xlu0 %v1204, 20
      %v1295 = vpop.permute.xlu0 %1294
      %1296 = vrot.lane.b32.xlu0 %v1205, 20
      %v1297 = vpop.permute.xlu0 %1296
      %1298 = vrot.lane.b32.xlu0 %v1206, 20
      %v1299 = vpop.permute.xlu0 %1298
      %1300 = vrot.lane.b32.xlu0 %v1207, 20
      %v1301 = vpop.permute.xlu0 %1300
      %1302 = vrot.lane.b32.xlu0 %v1208, 20
      %v1303 = vpop.permute.xlu0 %1302
      %1304 = vrot.lane.b32.xlu0 %v1209, 20
      %v1305 = vpop.permute.xlu0 %1304
      %vm1338 = vcmask 195744
      %1339 = vst.msk [vmem:[#allocation3] sm:$0xff] %vm1338, %v1243
      %1340 = vst.msk [vmem:[#allocation3 + $0x8] sm:$0xff] %vm1338, %v1245
      %1341 = vst.msk [vmem:[#allocation3 + $0x10] sm:$0xff] %vm1338, %v1247
      %1342 = vst.msk [vmem:[#allocation3 + $0x18] sm:$0xff] %vm1338, %v1249
      %1343 = vst.msk [vmem:[#allocation3 + $0x20] sm:$0xff] %vm1338, %v1251
      %1344 = vst.msk [vmem:[#allocation3 + $0x28] sm:$0xff] %vm1338, %v1253
      %1345 = vst.msk [vmem:[#allocation3 + $0x30] sm:$0xff] %vm1338, %v1255
      %1346 = vst.msk [vmem:[#allocation3 + $0x38] sm:$0xff] %vm1338, %v1257
      %1347 = vst.msk [vmem:[#allocation3 + $0x40] sm:$0xff] %vm1338, %v1259
      %1348 = vst.msk [vmem:[#allocation3 + $0x48] sm:$0xff] %vm1338, %v1261
      %1349 = vst.msk [vmem:[#allocation3 + $0x50] sm:$0xff] %vm1338, %v1263
      %1350 = vst.msk [vmem:[#allocation3 + $0x58] sm:$0xff] %vm1338, %v1265
      %1351 = vst.msk [vmem:[#allocation3 + $0x60] sm:$0xff] %vm1338, %v1267
      %1352 = vst.msk [vmem:[#allocation3 + $0x68] sm:$0xff] %vm1338, %v1269
      %1353 = vst.msk [vmem:[#allocation3 + $0x70] sm:$0xff] %vm1338, %v1271
      %1354 = vst.msk [vmem:[#allocation3 + $0x78] sm:$0xff] %vm1338, %v1273
      %1355 = vst.msk [vmem:[#allocation3 + $0x80] sm:$0xff] %vm1338, %v1275
      %1356 = vst.msk [vmem:[#allocation3 + $0x88] sm:$0xff] %vm1338, %v1277
      %1357 = vst.msk [vmem:[#allocation3 + $0x90] sm:$0xff] %vm1338, %v1279
      %1358 = vst.msk [vmem:[#allocation3 + $0x98] sm:$0xff] %vm1338, %v1281
      %1359 = vst.msk [vmem:[#allocation3 + $0xa0] sm:$0xff] %vm1338, %v1283
      %1360 = vst.msk [vmem:[#allocation3 + $0xa8] sm:$0xff] %vm1338, %v1285
      %1361 = vst.msk [vmem:[#allocation3 + $0xb0] sm:$0xff] %vm1338, %v1287
      %1362 = vst.msk [vmem:[#allocation3 + $0xb8] sm:$0xff] %vm1338, %v1289
      %1363 = vst.msk [vmem:[#allocation3 + $0xc0] sm:$0xff] %vm1338, %v1291
      %1364 = vst.msk [vmem:[#allocation3 + $0xc8] sm:$0xff] %vm1338, %v1293
      %1365 = vst.msk [vmem:[#allocation3 + $0xd0] sm:$0xff] %vm1338, %v1295
      %1366 = vst.msk [vmem:[#allocation3 + $0xd8] sm:$0xff] %vm1338, %v1297
      %1367 = vst.msk [vmem:[#allocation3 + $0xe0] sm:$0xff] %vm1338, %v1299
      %1368 = vst.msk [vmem:[#allocation3 + $0xe8] sm:$0xff] %vm1338, %v1301
      %1369 = vst.msk [vmem:[#allocation3 + $0xf0] sm:$0xff] %vm1338, %v1303
      %1370 = vst.msk [vmem:[#allocation3 + $0xf8] sm:$0xff] %vm1338, %v1305
      %s1371 = scalar_lea.vmem [#allocation2], 48
      %v1372 = vld [vmem:[%s1371] sm:$0xff]
      %v1373 = vld [vmem:[%s1371 + $0x8] sm:$0xff]
      %v1374 = vld [vmem:[%s1371 + $0x18] sm:$0xff]
      %v1375 = vld [vmem:[%s1371 + $0x20] sm:$0xff]
      %v1376 = vld [vmem:[%s1371 + $0x30] sm:$0xff]
      %v1377 = vld [vmem:[%s1371 + $0x38] sm:$0xff]
      %v1378 = vld [vmem:[%s1371 + $0x48] sm:$0xff]
      %v1379 = vld [vmem:[%s1371 + $0x50] sm:$0xff]
      %v1380 = vld [vmem:[%s1371 + $0x60] sm:$0xff]
      %v1381 = vld [vmem:[%s1371 + $0x68] sm:$0xff]
      %v1382 = vld [vmem:[%s1371 + $0x78] sm:$0xff]
      %v1383 = vld [vmem:[%s1371 + $0x80] sm:$0xff]
      %v1384 = vld [vmem:[%s1371 + $0x90] sm:$0xff]
      %v1385 = vld [vmem:[%s1371 + $0x98] sm:$0xff]
      %v1386 = vld [vmem:[%s1371 + $0xa8] sm:$0xff]
      %v1387 = vld [vmem:[%s1371 + $0xb0] sm:$0xff]
      %v1388 = vld [vmem:[%s1371 + $0xc0] sm:$0xff]
      %v1389 = vld [vmem:[%s1371 + $0xc8] sm:$0xff]
      %v1390 = vld [vmem:[%s1371 + $0xd8] sm:$0xff]
      %v1391 = vld [vmem:[%s1371 + $0xe0] sm:$0xff]
      %v1392 = vld [vmem:[%s1371 + $0xf0] sm:$0xff]
      %v1393 = vld [vmem:[%s1371 + $0xf8] sm:$0xff]
      %v1394 = vld [vmem:[%s1371 + $0x108] sm:$0xff]
      %v1395 = vld [vmem:[%s1371 + $0x110] sm:$0xff]
      %v1396 = vld [vmem:[%s1371 + $0x120] sm:$0xff]
      %v1397 = vld [vmem:[%s1371 + $0x128] sm:$0xff]
      %v1398 = vld [vmem:[%s1371 + $0x138] sm:$0xff]
      %v1399 = vld [vmem:[%s1371 + $0x140] sm:$0xff]
      %v1400 = vld [vmem:[%s1371 + $0x150] sm:$0xff]
      %v1401 = vld [vmem:[%s1371 + $0x158] sm:$0xff]
      %v1402 = vld [vmem:[%s1371 + $0x168] sm:$0xff]
      %v1403 = vld [vmem:[%s1371 + $0x170] sm:$0xff]
      %1436 = vrot.lane.b32.xlu0 %v1372, 24
      %v1437 = vpop.permute.xlu0 %1436
      %1438 = vrot.lane.b32.xlu0 %v1373, 24
      %v1439 = vpop.permute.xlu0 %1438
      %1440 = vrot.lane.b32.xlu0 %v1374, 24
      %v1441 = vpop.permute.xlu0 %1440
      %1442 = vrot.lane.b32.xlu0 %v1375, 24
      %v1443 = vpop.permute.xlu0 %1442
      %1444 = vrot.lane.b32.xlu0 %v1376, 24
      %v1445 = vpop.permute.xlu0 %1444
      %1446 = vrot.lane.b32.xlu0 %v1377, 24
      %v1447 = vpop.permute.xlu0 %1446
      %1448 = vrot.lane.b32.xlu0 %v1378, 24
      %v1449 = vpop.permute.xlu0 %1448
      %1450 = vrot.lane.b32.xlu0 %v1379, 24
      %v1451 = vpop.permute.xlu0 %1450
      %1452 = vrot.lane.b32.xlu0 %v1380, 24
      %v1453 = vpop.permute.xlu0 %1452
      %1454 = vrot.lane.b32.xlu0 %v1381, 24
      %v1455 = vpop.permute.xlu0 %1454
      %1456 = vrot.lane.b32.xlu0 %v1382, 24
      %v1457 = vpop.permute.xlu0 %1456
      %1458 = vrot.lane.b32.xlu0 %v1383, 24
      %v1459 = vpop.permute.xlu0 %1458
      %1460 = vrot.lane.b32.xlu0 %v1384, 24
      %v1461 = vpop.permute.xlu0 %1460
      %1462 = vrot.lane.b32.xlu0 %v1385, 24
      %v1463 = vpop.permute.xlu0 %1462
      %1464 = vrot.lane.b32.xlu0 %v1386, 24
      %v1465 = vpop.permute.xlu0 %1464
      %1466 = vrot.lane.b32.xlu0 %v1387, 24
      %v1467 = vpop.permute.xlu0 %1466
      %1468 = vrot.lane.b32.xlu0 %v1388, 24
      %v1469 = vpop.permute.xlu0 %1468
      %1470 = vrot.lane.b32.xlu0 %v1389, 24
      %v1471 = vpop.permute.xlu0 %1470
      %1472 = vrot.lane.b32.xlu0 %v1390, 24
      %v1473 = vpop.permute.xlu0 %1472
      %1474 = vrot.lane.b32.xlu0 %v1391, 24
      %v1475 = vpop.permute.xlu0 %1474
      %1476 = vrot.lane.b32.xlu0 %v1392, 24
      %v1477 = vpop.permute.xlu0 %1476
      %1478 = vrot.lane.b32.xlu0 %v1393, 24
      %v1479 = vpop.permute.xlu0 %1478
      %1480 = vrot.lane.b32.xlu0 %v1394, 24
      %v1481 = vpop.permute.xlu0 %1480
      %1482 = vrot.lane.b32.xlu0 %v1395, 24
      %v1483 = vpop.permute.xlu0 %1482
      %1484 = vrot.lane.b32.xlu0 %v1396, 24
      %v1485 = vpop.permute.xlu0 %1484
      %1486 = vrot.lane.b32.xlu0 %v1397, 24
      %v1487 = vpop.permute.xlu0 %1486
      %1488 = vrot.lane.b32.xlu0 %v1398, 24
      %v1489 = vpop.permute.xlu0 %1488
      %1490 = vrot.lane.b32.xlu0 %v1399, 24
      %v1491 = vpop.permute.xlu0 %1490
      %1492 = vrot.lane.b32.xlu0 %v1400, 24
      %v1493 = vpop.permute.xlu0 %1492
      %1494 = vrot.lane.b32.xlu0 %v1401, 24
      %v1495 = vpop.permute.xlu0 %1494
      %1496 = vrot.lane.b32.xlu0 %v1402, 24
      %v1497 = vpop.permute.xlu0 %1496
      %1498 = vrot.lane.b32.xlu0 %v1403, 24
      %v1499 = vpop.permute.xlu0 %1498
      %vm1532 = vcmask 228544
      %1533 = vst.msk [vmem:[#allocation3] sm:$0xff] %vm1532, %v1437
      %1534 = vst.msk [vmem:[#allocation3 + $0x8] sm:$0xff] %vm1532, %v1439
      %1535 = vst.msk [vmem:[#allocation3 + $0x10] sm:$0xff] %vm1532, %v1441
      %1536 = vst.msk [vmem:[#allocation3 + $0x18] sm:$0xff] %vm1532, %v1443
      %1537 = vst.msk [vmem:[#allocation3 + $0x20] sm:$0xff] %vm1532, %v1445
      %1538 = vst.msk [vmem:[#allocation3 + $0x28] sm:$0xff] %vm1532, %v1447
      %1539 = vst.msk [vmem:[#allocation3 + $0x30] sm:$0xff] %vm1532, %v1449
      %1540 = vst.msk [vmem:[#allocation3 + $0x38] sm:$0xff] %vm1532, %v1451
      %1541 = vst.msk [vmem:[#allocation3 + $0x40] sm:$0xff] %vm1532, %v1453
      %1542 = vst.msk [vmem:[#allocation3 + $0x48] sm:$0xff] %vm1532, %v1455
      %1543 = vst.msk [vmem:[#allocation3 + $0x50] sm:$0xff] %vm1532, %v1457
      %1544 = vst.msk [vmem:[#allocation3 + $0x58] sm:$0xff] %vm1532, %v1459
      %1545 = vst.msk [vmem:[#allocation3 + $0x60] sm:$0xff] %vm1532, %v1461
      %1546 = vst.msk [vmem:[#allocation3 + $0x68] sm:$0xff] %vm1532, %v1463
      %1547 = vst.msk [vmem:[#allocation3 + $0x70] sm:$0xff] %vm1532, %v1465
      %1548 = vst.msk [vmem:[#allocation3 + $0x78] sm:$0xff] %vm1532, %v1467
      %1549 = vst.msk [vmem:[#allocation3 + $0x80] sm:$0xff] %vm1532, %v1469
      %1550 = vst.msk [vmem:[#allocation3 + $0x88] sm:$0xff] %vm1532, %v1471
      %1551 = vst.msk [vmem:[#allocation3 + $0x90] sm:$0xff] %vm1532, %v1473
      %1552 = vst.msk [vmem:[#allocation3 + $0x98] sm:$0xff] %vm1532, %v1475
      %1553 = vst.msk [vmem:[#allocation3 + $0xa0] sm:$0xff] %vm1532, %v1477
      %1554 = vst.msk [vmem:[#allocation3 + $0xa8] sm:$0xff] %vm1532, %v1479
      %1555 = vst.msk [vmem:[#allocation3 + $0xb0] sm:$0xff] %vm1532, %v1481
      %1556 = vst.msk [vmem:[#allocation3 + $0xb8] sm:$0xff] %vm1532, %v1483
      %1557 = vst.msk [vmem:[#allocation3 + $0xc0] sm:$0xff] %vm1532, %v1485
      %1558 = vst.msk [vmem:[#allocation3 + $0xc8] sm:$0xff] %vm1532, %v1487
      %1559 = vst.msk [vmem:[#allocation3 + $0xd0] sm:$0xff] %vm1532, %v1489
      %1560 = vst.msk [vmem:[#allocation3 + $0xd8] sm:$0xff] %vm1532, %v1491
      %1561 = vst.msk [vmem:[#allocation3 + $0xe0] sm:$0xff] %vm1532, %v1493
      %1562 = vst.msk [vmem:[#allocation3 + $0xe8] sm:$0xff] %vm1532, %v1495
      %1563 = vst.msk [vmem:[#allocation3 + $0xf0] sm:$0xff] %vm1532, %v1497
      %1564 = vst.msk [vmem:[#allocation3 + $0xf8] sm:$0xff] %vm1532, %v1499
      %v1565 = vld [vmem:[%s1371 + $0x1] sm:$0xff]
      %v1566 = vld [vmem:[%s1371 + $0x9] sm:$0xff]
      %v1567 = vld [vmem:[%s1371 + $0x19] sm:$0xff]
      %v1568 = vld [vmem:[%s1371 + $0x21] sm:$0xff]
      %v1569 = vld [vmem:[%s1371 + $0x31] sm:$0xff]
      %v1570 = vld [vmem:[%s1371 + $0x39] sm:$0xff]
      %v1571 = vld [vmem:[%s1371 + $0x49] sm:$0xff]
      %v1572 = vld [vmem:[%s1371 + $0x51] sm:$0xff]
      %v1573 = vld [vmem:[%s1371 + $0x61] sm:$0xff]
      %v1574 = vld [vmem:[%s1371 + $0x69] sm:$0xff]
      %v1575 = vld [vmem:[%s1371 + $0x79] sm:$0xff]
      %v1576 = vld [vmem:[%s1371 + $0x81] sm:$0xff]
      %v1577 = vld [vmem:[%s1371 + $0x91] sm:$0xff]
      %v1578 = vld [vmem:[%s1371 + $0x99] sm:$0xff]
      %v1579 = vld [vmem:[%s1371 + $0xa9] sm:$0xff]
      %v1580 = vld [vmem:[%s1371 + $0xb1] sm:$0xff]
      %v1581 = vld [vmem:[%s1371 + $0xc1] sm:$0xff]
      %v1582 = vld [vmem:[%s1371 + $0xc9] sm:$0xff]
      %v1583 = vld [vmem:[%s1371 + $0xd9] sm:$0xff]
      %v1584 = vld [vmem:[%s1371 + $0xe1] sm:$0xff]
      %v1585 = vld [vmem:[%s1371 + $0xf1] sm:$0xff]
      %v1586 = vld [vmem:[%s1371 + $0xf9] sm:$0xff]
      %v1587 = vld [vmem:[%s1371 + $0x109] sm:$0xff]
      %v1588 = vld [vmem:[%s1371 + $0x111] sm:$0xff]
      %v1589 = vld [vmem:[%s1371 + $0x121] sm:$0xff]
      %v1590 = vld [vmem:[%s1371 + $0x129] sm:$0xff]
      %v1591 = vld [vmem:[%s1371 + $0x139] sm:$0xff]
      %v1592 = vld [vmem:[%s1371 + $0x141] sm:$0xff]
      %v1593 = vld [vmem:[%s1371 + $0x151] sm:$0xff]
      %v1594 = vld [vmem:[%s1371 + $0x159] sm:$0xff]
      %v1595 = vld [vmem:[%s1371 + $0x169] sm:$0xff]
      %v1596 = vld [vmem:[%s1371 + $0x171] sm:$0xff]
      %1629 = vrot.lane.b32.xlu0 %v1565, 28
      %v1630 = vpop.permute.xlu0 %1629
      %1631 = vrot.lane.b32.xlu0 %v1566, 28
      %v1632 = vpop.permute.xlu0 %1631
      %1633 = vrot.lane.b32.xlu0 %v1567, 28
      %v1634 = vpop.permute.xlu0 %1633
      %1635 = vrot.lane.b32.xlu0 %v1568, 28
      %v1636 = vpop.permute.xlu0 %1635
      %1637 = vrot.lane.b32.xlu0 %v1569, 28
      %v1638 = vpop.permute.xlu0 %1637
      %1639 = vrot.lane.b32.xlu0 %v1570, 28
      %v1640 = vpop.permute.xlu0 %1639
      %1641 = vrot.lane.b32.xlu0 %v1571, 28
      %v1642 = vpop.permute.xlu0 %1641
      %1643 = vrot.lane.b32.xlu0 %v1572, 28
      %v1644 = vpop.permute.xlu0 %1643
      %1645 = vrot.lane.b32.xlu0 %v1573, 28
      %v1646 = vpop.permute.xlu0 %1645
      %1647 = vrot.lane.b32.xlu0 %v1574, 28
      %v1648 = vpop.permute.xlu0 %1647
      %1649 = vrot.lane.b32.xlu0 %v1575, 28
      %v1650 = vpop.permute.xlu0 %1649
      %1651 = vrot.lane.b32.xlu0 %v1576, 28
      %v1652 = vpop.permute.xlu0 %1651
      %1653 = vrot.lane.b32.xlu0 %v1577, 28
      %v1654 = vpop.permute.xlu0 %1653
      %1655 = vrot.lane.b32.xlu0 %v1578, 28
      %v1656 = vpop.permute.xlu0 %1655
      %1657 = vrot.lane.b32.xlu0 %v1579, 28
      %v1658 = vpop.permute.xlu0 %1657
      %1659 = vrot.lane.b32.xlu0 %v1580, 28
      %v1660 = vpop.permute.xlu0 %1659
      %1661 = vrot.lane.b32.xlu0 %v1581, 28
      %v1662 = vpop.permute.xlu0 %1661
      %1663 = vrot.lane.b32.xlu0 %v1582, 28
      %v1664 = vpop.permute.xlu0 %1663
      %1665 = vrot.lane.b32.xlu0 %v1583, 28
      %v1666 = vpop.permute.xlu0 %1665
      %1667 = vrot.lane.b32.xlu0 %v1584, 28
      %v1668 = vpop.permute.xlu0 %1667
      %1669 = vrot.lane.b32.xlu0 %v1585, 28
      %v1670 = vpop.permute.xlu0 %1669
      %1671 = vrot.lane.b32.xlu0 %v1586, 28
      %v1672 = vpop.permute.xlu0 %1671
      %1673 = vrot.lane.b32.xlu0 %v1587, 28
      %v1674 = vpop.permute.xlu0 %1673
      %1675 = vrot.lane.b32.xlu0 %v1588, 28
      %v1676 = vpop.permute.xlu0 %1675
      %1677 = vrot.lane.b32.xlu0 %v1589, 28
      %v1678 = vpop.permute.xlu0 %1677
      %1679 = vrot.lane.b32.xlu0 %v1590, 28
      %v1680 = vpop.permute.xlu0 %1679
      %1681 = vrot.lane.b32.xlu0 %v1591, 28
      %v1682 = vpop.permute.xlu0 %1681
      %1683 = vrot.lane.b32.xlu0 %v1592, 28
      %v1684 = vpop.permute.xlu0 %1683
      %1685 = vrot.lane.b32.xlu0 %v1593, 28
      %v1686 = vpop.permute.xlu0 %1685
      %1687 = vrot.lane.b32.xlu0 %v1594, 28
      %v1688 = vpop.permute.xlu0 %1687
      %1689 = vrot.lane.b32.xlu0 %v1595, 28
      %v1690 = vpop.permute.xlu0 %1689
      %1691 = vrot.lane.b32.xlu0 %v1596, 28
      %v1692 = vpop.permute.xlu0 %1691
      %vm1725 = vcmask 261344
      %1726 = vst.msk [vmem:[#allocation3] sm:$0xff] %vm1725, %v1630
      %1727 = vst.msk [vmem:[#allocation3 + $0x8] sm:$0xff] %vm1725, %v1632
      %1728 = vst.msk [vmem:[#allocation3 + $0x10] sm:$0xff] %vm1725, %v1634
      %1729 = vst.msk [vmem:[#allocation3 + $0x18] sm:$0xff] %vm1725, %v1636
      %1730 = vst.msk [vmem:[#allocation3 + $0x20] sm:$0xff] %vm1725, %v1638
      %1731 = vst.msk [vmem:[#allocation3 + $0x28] sm:$0xff] %vm1725, %v1640
      %1732 = vst.msk [vmem:[#allocation3 + $0x30] sm:$0xff] %vm1725, %v1642
      %1733 = vst.msk [vmem:[#allocation3 + $0x38] sm:$0xff] %vm1725, %v1644
      %1734 = vst.msk [vmem:[#allocation3 + $0x40] sm:$0xff] %vm1725, %v1646
      %1735 = vst.msk [vmem:[#allocation3 + $0x48] sm:$0xff] %vm1725, %v1648
      %1736 = vst.msk [vmem:[#allocation3 + $0x50] sm:$0xff] %vm1725, %v1650
      %1737 = vst.msk [vmem:[#allocation3 + $0x58] sm:$0xff] %vm1725, %v1652
      %1738 = vst.msk [vmem:[#allocation3 + $0x60] sm:$0xff] %vm1725, %v1654
      %1739 = vst.msk [vmem:[#allocation3 + $0x68] sm:$0xff] %vm1725, %v1656
      %1740 = vst.msk [vmem:[#allocation3 + $0x70] sm:$0xff] %vm1725, %v1658
      %1741 = vst.msk [vmem:[#allocation3 + $0x78] sm:$0xff] %vm1725, %v1660
      %1742 = vst.msk [vmem:[#allocation3 + $0x80] sm:$0xff] %vm1725, %v1662
      %1743 = vst.msk [vmem:[#allocation3 + $0x88] sm:$0xff] %vm1725, %v1664
      %1744 = vst.msk [vmem:[#allocation3 + $0x90] sm:$0xff] %vm1725, %v1666
      %1745 = vst.msk [vmem:[#allocation3 + $0x98] sm:$0xff] %vm1725, %v1668
      %1746 = vst.msk [vmem:[#allocation3 + $0xa0] sm:$0xff] %vm1725, %v1670
      %1747 = vst.msk [vmem:[#allocation3 + $0xa8] sm:$0xff] %vm1725, %v1672
      %1748 = vst.msk [vmem:[#allocation3 + $0xb0] sm:$0xff] %vm1725, %v1674
      %1749 = vst.msk [vmem:[#allocation3 + $0xb8] sm:$0xff] %vm1725, %v1676
      %1750 = vst.msk [vmem:[#allocation3 + $0xc0] sm:$0xff] %vm1725, %v1678
      %1751 = vst.msk [vmem:[#allocation3 + $0xc8] sm:$0xff] %vm1725, %v1680
      %1752 = vst.msk [vmem:[#allocation3 + $0xd0] sm:$0xff] %vm1725, %v1682
      %1753 = vst.msk [vmem:[#allocation3 + $0xd8] sm:$0xff] %vm1725, %v1684
      %1754 = vst.msk [vmem:[#allocation3 + $0xe0] sm:$0xff] %vm1725, %v1686
      %1755 = vst.msk [vmem:[#allocation3 + $0xe8] sm:$0xff] %vm1725, %v1688
      %1756 = vst.msk [vmem:[#allocation3 + $0xf0] sm:$0xff] %vm1725, %v1690
      %1757 = vst.msk [vmem:[#allocation3 + $0xf8] sm:$0xff] %vm1725, %v1692
      %v1758 = vld [vmem:[%s1371 + $0x2] sm:$0xff]
      %v1759 = vld [vmem:[%s1371 + $0xa] sm:$0xff]
      %v1760 = vld [vmem:[%s1371 + $0x1a] sm:$0xff]
      %v1761 = vld [vmem:[%s1371 + $0x22] sm:$0xff]
      %v1762 = vld [vmem:[%s1371 + $0x32] sm:$0xff]
      %v1763 = vld [vmem:[%s1371 + $0x3a] sm:$0xff]
      %v1764 = vld [vmem:[%s1371 + $0x4a] sm:$0xff]
      %v1765 = vld [vmem:[%s1371 + $0x52] sm:$0xff]
      %v1766 = vld [vmem:[%s1371 + $0x62] sm:$0xff]
      %v1767 = vld [vmem:[%s1371 + $0x6a] sm:$0xff]
      %v1768 = vld [vmem:[%s1371 + $0x7a] sm:$0xff]
      %v1769 = vld [vmem:[%s1371 + $0x82] sm:$0xff]
      %v1770 = vld [vmem:[%s1371 + $0x92] sm:$0xff]
      %v1771 = vld [vmem:[%s1371 + $0x9a] sm:$0xff]
      %v1772 = vld [vmem:[%s1371 + $0xaa] sm:$0xff]
      %v1773 = vld [vmem:[%s1371 + $0xb2] sm:$0xff]
      %v1774 = vld [vmem:[%s1371 + $0xc2] sm:$0xff]
      %v1775 = vld [vmem:[%s1371 + $0xca] sm:$0xff]
      %v1776 = vld [vmem:[%s1371 + $0xda] sm:$0xff]
      %v1777 = vld [vmem:[%s1371 + $0xe2] sm:$0xff]
      %v1778 = vld [vmem:[%s1371 + $0xf2] sm:$0xff]
      %v1779 = vld [vmem:[%s1371 + $0xfa] sm:$0xff]
      %v1780 = vld [vmem:[%s1371 + $0x10a] sm:$0xff]
      %v1781 = vld [vmem:[%s1371 + $0x112] sm:$0xff]
      %v1782 = vld [vmem:[%s1371 + $0x122] sm:$0xff]
      %v1783 = vld [vmem:[%s1371 + $0x12a] sm:$0xff]
      %v1784 = vld [vmem:[%s1371 + $0x13a] sm:$0xff]
      %v1785 = vld [vmem:[%s1371 + $0x142] sm:$0xff]
      %v1786 = vld [vmem:[%s1371 + $0x152] sm:$0xff]
      %v1787 = vld [vmem:[%s1371 + $0x15a] sm:$0xff]
      %v1788 = vld [vmem:[%s1371 + $0x16a] sm:$0xff]
      %v1789 = vld [vmem:[%s1371 + $0x172] sm:$0xff]
      %1822 = vrot.lane.b32.xlu0 %v1758, 32
      %v1823 = vpop.permute.xlu0 %1822
      %1824 = vrot.lane.b32.xlu0 %v1759, 32
      %v1825 = vpop.permute.xlu0 %1824
      %1826 = vrot.lane.b32.xlu0 %v1760, 32
      %v1827 = vpop.permute.xlu0 %1826
      %1828 = vrot.lane.b32.xlu0 %v1761, 32
      %v1829 = vpop.permute.xlu0 %1828
      %1830 = vrot.lane.b32.xlu0 %v1762, 32
      %v1831 = vpop.permute.xlu0 %1830
      %1832 = vrot.lane.b32.xlu0 %v1763, 32
      %v1833 = vpop.permute.xlu0 %1832
      %1834 = vrot.lane.b32.xlu0 %v1764, 32
      %v1835 = vpop.permute.xlu0 %1834
      %1836 = vrot.lane.b32.xlu0 %v1765, 32
      %v1837 = vpop.permute.xlu0 %1836
      %1838 = vrot.lane.b32.xlu0 %v1766, 32
      %v1839 = vpop.permute.xlu0 %1838
      %1840 = vrot.lane.b32.xlu0 %v1767, 32
      %v1841 = vpop.permute.xlu0 %1840
      %1842 = vrot.lane.b32.xlu0 %v1768, 32
      %v1843 = vpop.permute.xlu0 %1842
      %1844 = vrot.lane.b32.xlu0 %v1769, 32
      %v1845 = vpop.permute.xlu0 %1844
      %1846 = vrot.lane.b32.xlu0 %v1770, 32
      %v1847 = vpop.permute.xlu0 %1846
      %1848 = vrot.lane.b32.xlu0 %v1771, 32
      %v1849 = vpop.permute.xlu0 %1848
      %1850 = vrot.lane.b32.xlu0 %v1772, 32
      %v1851 = vpop.permute.xlu0 %1850
      %1852 = vrot.lane.b32.xlu0 %v1773, 32
      %v1853 = vpop.permute.xlu0 %1852
      %1854 = vrot.lane.b32.xlu0 %v1774, 32
      %v1855 = vpop.permute.xlu0 %1854
      %1856 = vrot.lane.b32.xlu0 %v1775, 32
      %v1857 = vpop.permute.xlu0 %1856
      %1858 = vrot.lane.b32.xlu0 %v1776, 32
      %v1859 = vpop.permute.xlu0 %1858
      %1860 = vrot.lane.b32.xlu0 %v1777, 32
      %v1861 = vpop.permute.xlu0 %1860
      %1862 = vrot.lane.b32.xlu0 %v1778, 32
      %v1863 = vpop.permute.xlu0 %1862
      %1864 = vrot.lane.b32.xlu0 %v1779, 32
      %v1865 = vpop.permute.xlu0 %1864
      %1866 = vrot.lane.b32.xlu0 %v1780, 32
      %v1867 = vpop.permute.xlu0 %1866
      %1868 = vrot.lane.b32.xlu0 %v1781, 32
      %v1869 = vpop.permute.xlu0 %1868
      %1870 = vrot.lane.b32.xlu0 %v1782, 32
      %v1871 = vpop.permute.xlu0 %1870
      %1872 = vrot.lane.b32.xlu0 %v1783, 32
      %v1873 = vpop.permute.xlu0 %1872
      %1874 = vrot.lane.b32.xlu0 %v1784, 32
      %v1875 = vpop.permute.xlu0 %1874
      %1876 = vrot.lane.b32.xlu0 %v1785, 32
      %v1877 = vpop.permute.xlu0 %1876
      %1878 = vrot.lane.b32.xlu0 %v1786, 32
      %v1879 = vpop.permute.xlu0 %1878
      %1880 = vrot.lane.b32.xlu0 %v1787, 32
      %v1881 = vpop.permute.xlu0 %1880
      %1882 = vrot.lane.b32.xlu0 %v1788, 32
      %v1883 = vpop.permute.xlu0 %1882
      %1884 = vrot.lane.b32.xlu0 %v1789, 32
      %v1885 = vpop.permute.xlu0 %1884
      %vm1918 = vcmask 294144
      %1919 = vst.msk [vmem:[#allocation3] sm:$0xff] %vm1918, %v1823
      %1920 = vst.msk [vmem:[#allocation3 + $0x8] sm:$0xff] %vm1918, %v1825
      %1921 = vst.msk [vmem:[#allocation3 + $0x10] sm:$0xff] %vm1918, %v1827
      %1922 = vst.msk [vmem:[#allocation3 + $0x18] sm:$0xff] %vm1918, %v1829
      %1923 = vst.msk [vmem:[#allocation3 + $0x20] sm:$0xff] %vm1918, %v1831
      %1924 = vst.msk [vmem:[#allocation3 + $0x28] sm:$0xff] %vm1918, %v1833
      %1925 = vst.msk [vmem:[#allocation3 + $0x30] sm:$0xff] %vm1918, %v1835
      %1926 = vst.msk [vmem:[#allocation3 + $0x38] sm:$0xff] %vm1918, %v1837
      %1927 = vst.msk [vmem:[#allocation3 + $0x40] sm:$0xff] %vm1918, %v1839
      %1928 = vst.msk [vmem:[#allocation3 + $0x48] sm:$0xff] %vm1918, %v1841
      %1929 = vst.msk [vmem:[#allocation3 + $0x50] sm:$0xff] %vm1918, %v1843
      %1930 = vst.msk [vmem:[#allocation3 + $0x58] sm:$0xff] %vm1918, %v1845
      %1931 = vst.msk [vmem:[#allocation3 + $0x60] sm:$0xff] %vm1918, %v1847
      %1932 = vst.msk [vmem:[#allocation3 + $0x68] sm:$0xff] %vm1918, %v1849
      %1933 = vst.msk [vmem:[#allocation3 + $0x70] sm:$0xff] %vm1918, %v1851
      %1934 = vst.msk [vmem:[#allocation3 + $0x78] sm:$0xff] %vm1918, %v1853
      %1935 = vst.msk [vmem:[#allocation3 + $0x80] sm:$0xff] %vm1918, %v1855
      %1936 = vst.msk [vmem:[#allocation3 + $0x88] sm:$0xff] %vm1918, %v1857
      %1937 = vst.msk [vmem:[#allocation3 + $0x90] sm:$0xff] %vm1918, %v1859
      %1938 = vst.msk [vmem:[#allocation3 + $0x98] sm:$0xff] %vm1918, %v1861
      %1939 = vst.msk [vmem:[#allocation3 + $0xa0] sm:$0xff] %vm1918, %v1863
      %1940 = vst.msk [vmem:[#allocation3 + $0xa8] sm:$0xff] %vm1918, %v1865
      %1941 = vst.msk [vmem:[#allocation3 + $0xb0] sm:$0xff] %vm1918, %v1867
      %1942 = vst.msk [vmem:[#allocation3 + $0xb8] sm:$0xff] %vm1918, %v1869
      %1943 = vst.msk [vmem:[#allocation3 + $0xc0] sm:$0xff] %vm1918, %v1871
      %1944 = vst.msk [vmem:[#allocation3 + $0xc8] sm:$0xff] %vm1918, %v1873
      %1945 = vst.msk [vmem:[#allocation3 + $0xd0] sm:$0xff] %vm1918, %v1875
      %1946 = vst.msk [vmem:[#allocation3 + $0xd8] sm:$0xff] %vm1918, %v1877
      %1947 = vst.msk [vmem:[#allocation3 + $0xe0] sm:$0xff] %vm1918, %v1879
      %1948 = vst.msk [vmem:[#allocation3 + $0xe8] sm:$0xff] %vm1918, %v1881
      %1949 = vst.msk [vmem:[#allocation3 + $0xf0] sm:$0xff] %vm1918, %v1883
      %1950 = vst.msk [vmem:[#allocation3 + $0xf8] sm:$0xff] %vm1918, %v1885
      %v1951 = vld [vmem:[#allocation3] sm:$0xff]
      %v1952 = vld [vmem:[#allocation3 + $0x8] sm:$0xff]
      %v1953 = vld [vmem:[#allocation3 + $0x10] sm:$0xff]
      %v1954 = vld [vmem:[#allocation3 + $0x18] sm:$0xff]
      %v1955 = vld [vmem:[#allocation3 + $0x20] sm:$0xff]
      %v1956 = vld [vmem:[#allocation3 + $0x28] sm:$0xff]
      %v1957 = vld [vmem:[#allocation3 + $0x30] sm:$0xff]
      %v1958 = vld [vmem:[#allocation3 + $0x38] sm:$0xff]
      %v1959 = vld [vmem:[#allocation3 + $0x40] sm:$0xff]
      %v1960 = vld [vmem:[#allocation3 + $0x48] sm:$0xff]
      %v1961 = vld [vmem:[#allocation3 + $0x50] sm:$0xff]
      %v1962 = vld [vmem:[#allocation3 + $0x58] sm:$0xff]
      %v1963 = vld [vmem:[#allocation3 + $0x60] sm:$0xff]
      %v1964 = vld [vmem:[#allocation3 + $0x68] sm:$0xff]
      %v1965 = vld [vmem:[#allocation3 + $0x70] sm:$0xff]
      %v1966 = vld [vmem:[#allocation3 + $0x78] sm:$0xff]
      %v1967 = vld [vmem:[#allocation3 + $0x80] sm:$0xff]
      %v1968 = vld [vmem:[#allocation3 + $0x88] sm:$0xff]
      %v1969 = vld [vmem:[#allocation3 + $0x90] sm:$0xff]
      %v1970 = vld [vmem:[#allocation3 + $0x98] sm:$0xff]
      %v1971 = vld [vmem:[#allocation3 + $0xa0] sm:$0xff]
      %v1972 = vld [vmem:[#allocation3 + $0xa8] sm:$0xff]
      %v1973 = vld [vmem:[#allocation3 + $0xb0] sm:$0xff]
      %v1974 = vld [vmem:[#allocation3 + $0xb8] sm:$0xff]
      %v1975 = vld [vmem:[#allocation3 + $0xc0] sm:$0xff]
      %v1976 = vld [vmem:[#allocation3 + $0xc8] sm:$0xff]
      %v1977 = vld [vmem:[#allocation3 + $0xd0] sm:$0xff]
      %v1978 = vld [vmem:[#allocation3 + $0xd8] sm:$0xff]
      %v1979 = vld [vmem:[#allocation3 + $0xe0] sm:$0xff]
      %v1980 = vld [vmem:[#allocation3 + $0xe8] sm:$0xff]
      %v1981 = vld [vmem:[#allocation3 + $0xf0] sm:$0xff]
      %v1982 = vld [vmem:[#allocation3 + $0xf8] sm:$0xff]
      %v1983 = vld [vmem:[%s1] sm:$0xff]
      %v1984 = vld [vmem:[%s1 + $0x8] sm:$0xff]
      %v1985 = vld [vmem:[%s1 + $0x10] sm:$0xff]
      %v1986 = vld [vmem:[%s1 + $0x18] sm:$0xff]
      %v1987 = vld [vmem:[%s1 + $0x20] sm:$0xf]
      %vm1988 = vcmask 293888
      %v1990 = vsel %vm1988, %v1951, 0
      %v1993 = vsel %vm1988, %v1952, 0
      %v1996 = vsel %vm1988, %v1953, 0
      %v1999 = vsel %vm1988, %v1954, 0
      %v2002 = vsel %vm1988, %v1955, 0
      %v2005 = vsel %vm1988, %v1956, 0
      %v2008 = vsel %vm1988, %v1957, 0
      %v2011 = vsel %vm1988, %v1958, 0
      %v2014 = vsel %vm1988, %v1959, 0
      %v2017 = vsel %vm1988, %v1960, 0
      %v2020 = vsel %vm1988, %v1961, 0
      %v2023 = vsel %vm1988, %v1962, 0
      %v2026 = vsel %vm1988, %v1963, 0
      %v2029 = vsel %vm1988, %v1964, 0
      %v2032 = vsel %vm1988, %v1965, 0
      %v2035 = vsel %vm1988, %v1966, 0
      %v2038 = vsel %vm1988, %v1967, 0
      %v2041 = vsel %vm1988, %v1968, 0
      %v2044 = vsel %vm1988, %v1969, 0
      %v2047 = vsel %vm1988, %v1970, 0
      %v2050 = vsel %vm1988, %v1971, 0
      %v2053 = vsel %vm1988, %v1972, 0
      %v2056 = vsel %vm1988, %v1973, 0
      %v2059 = vsel %vm1988, %v1974, 0
      %v2062 = vsel %vm1988, %v1975, 0
      %v2065 = vsel %vm1988, %v1976, 0
      %v2068 = vsel %vm1988, %v1977, 0
      %v2071 = vsel %vm1988, %v1978, 0
      %v2074 = vsel %vm1988, %v1979, 0
      %v2077 = vsel %vm1988, %v1980, 0
      %v2080 = vsel %vm1988, %v1981, 0
      %v2083 = vsel %vm1988, %v1982, 0
      %vm2085 = vcmask 1043456
      %v2087 = vsel %vm2085, %v1987, 0
      %2089 = vmatprep.subr.mxu0 0.0
      %2090 = vmatpush1.msra.mxu0 0.0
      %2091 = vmatprep.subr.mxu0 0.0
      %2092 = vmatpush1.msra.mxu0 0.0
      %2093 = vmatprep.subr.mxu0 0.0
      %2094 = vmatpush1.msra.mxu0 0.0
      %2095 = vmatprep.subr.mxu0 0.0
      %2096 = vmatpush1.msra.mxu0 0.0
      %2097 = vmatprep.subr.mxu0 0.0
      %2098 = vmatpush1.msra.mxu0 0.0
      %2099 = vmatprep.subr.mxu0 0.0
      %2100 = vmatpush1.msra.mxu0 0.0
      %2101 = vmatprep.subr.mxu0 0.0
      %2102 = vmatpush1.msra.mxu0 0.0
      %2103 = vmatprep.subr.mxu0 0.0
      %2104 = vmatpush1.msra.mxu0 0.0
      %2105 = vmatprep.subr.mxu0 0.0
      %2106 = vmatpush1.msra.mxu0 0.0
      %2107 = vmatprep.subr.mxu0 0.0
      %2108 = vmatpush1.msra.mxu0 0.0
      %2109 = vmatprep.subr.mxu0 0.0
      %2110 = vmatpush1.msra.mxu0 0.0
      %2111 = vmatprep.subr.mxu0 0.0
      %2112 = vmatpush1.msra.mxu0 %v2087
      %2113 = vmatprep.subr.mxu0 0.0
      %2114 = vmatpush1.msra.mxu0 %v1986
      %2115 = vmatprep.subr.mxu0 0.0
      %2116 = vmatpush1.msra.mxu0 %v1985
      %2117 = vmatprep.subr.mxu0 0.0
      %2118 = vmatpush1.msra.mxu0 %v1984
      %2119 = vmatprep.subr.mxu0 0.0
      %2120 = vmatpush1.msra.mxu0 %v1983
      %2121 = vmatprep.subr.mxu0 0.0
      %2122 = vmatpush2.msra.mxu0 0.0
      %2123 = vmatprep.subr.mxu0 0.0
      %2124 = vmatpush2.msra.mxu0 0.0
      %2125 = vmatprep.subr.mxu0 0.0
      %2126 = vmatpush2.msra.mxu0 0.0
      %2127 = vmatprep.subr.mxu0 0.0
      %2128 = vmatpush2.msra.mxu0 0.0
      %2129 = vmatprep.subr.mxu0 0.0
      %2130 = vmatpush2.msra.mxu0 0.0
      %2131 = vmatprep.subr.mxu0 0.0
      %2132 = vmatpush2.msra.mxu0 0.0
      %2133 = vmatprep.subr.mxu0 0.0
      %2134 = vmatpush2.msra.mxu0 0.0
      %2135 = vmatprep.subr.mxu0 0.0
      %2136 = vmatpush2.msra.mxu0 0.0
      %2137 = vmatprep.subr.mxu0 0.0
      %2138 = vmatpush2.msra.mxu0 0.0
      %2139 = vmatprep.subr.mxu0 0.0
      %2140 = vmatpush2.msra.mxu0 0.0
      %2141 = vmatprep.subr.mxu0 0.0
      %2142 = vmatpush2.msra.mxu0 0.0
      %2143 = vmatprep.subr.mxu0 0.0
      %2144 = vmatpush2.msra.mxu0 0.0
      %2145 = vmatprep.subr.mxu0 0.0
      %2146 = vmatpush2.msra.mxu0 0.0
      %2147 = vmatprep.subr.mxu0 0.0
      %2148 = vmatpush2.msra.mxu0 0.0
      %2149 = vmatprep.subr.mxu0 0.0
      %2150 = vmatpush2.msra.mxu0 0.0
      %2151 = vmatprep.subr.mxu0 0.0
      %2152 = vmatpush2.msra.mxu0 0.0
      %2153 = vmatprep.mubr.f32.mxu0 0.0
      %2154 = vmatmul.mubr.f32.gmra.mxu0 %v1990
      %v2155 = vpop.f32.mrf.mxu0
      %v2156 = vadd.f32 0.0, %v2155
      %v2157 = vpop.f32.mrf.mxu0
      %2158 = vmatprep.mubr.f32.mxu0 0.0
      %2159 = vmatmul.mubr.f32.gmra.mxu0 %v1993
      %v2160 = vpop.f32.mrf.mxu0
      %v2161 = vadd.f32 0.0, %v2160
      %v2162 = vpop.f32.mrf.mxu0
      %2163 = vmatprep.mubr.f32.mxu0 0.0
      %2164 = vmatmul.mubr.f32.gmra.mxu0 %v1996
      %v2165 = vpop.f32.mrf.mxu0
      %v2166 = vadd.f32 0.0, %v2165
      %v2167 = vpop.f32.mrf.mxu0
      %2168 = vmatprep.mubr.f32.mxu0 0.0
      %2169 = vmatmul.mubr.f32.gmra.mxu0 %v1999
      %v2170 = vpop.f32.mrf.mxu0
      %v2171 = vadd.f32 0.0, %v2170
      %v2172 = vpop.f32.mrf.mxu0
      %2173 = vmatprep.mubr.f32.mxu0 0.0
      %2174 = vmatmul.mubr.f32.gmra.mxu0 %v2002
      %v2175 = vpop.f32.mrf.mxu0
      %v2176 = vadd.f32 0.0, %v2175
      %v2177 = vpop.f32.mrf.mxu0
      %2178 = vmatprep.mubr.f32.mxu0 0.0
      %2179 = vmatmul.mubr.f32.gmra.mxu0 %v2005
      %v2180 = vpop.f32.mrf.mxu0
      %v2181 = vadd.f32 0.0, %v2180
      %v2182 = vpop.f32.mrf.mxu0
      %2183 = vmatprep.mubr.f32.mxu0 0.0
      %2184 = vmatmul.mubr.f32.gmra.mxu0 %v2008
      %v2185 = vpop.f32.mrf.mxu0
      %v2186 = vadd.f32 0.0, %v2185
      %v2187 = vpop.f32.mrf.mxu0
      %2188 = vmatprep.mubr.f32.mxu0 0.0
      %2189 = vmatmul.mubr.f32.gmra.mxu0 %v2011
      %v2190 = vpop.f32.mrf.mxu0
      %v2191 = vadd.f32 0.0, %v2190
      %v2192 = vpop.f32.mrf.mxu0
      %2193 = vmatprep.mubr.f32.mxu0 0.0
      %2194 = vmatmul.mubr.f32.gmra.mxu0 %v2014
      %v2195 = vpop.f32.mrf.mxu0
      %v2196 = vadd.f32 0.0, %v2195
      %v2197 = vpop.f32.mrf.mxu0
      %2198 = vmatprep.mubr.f32.mxu0 0.0
      %2199 = vmatmul.mubr.f32.gmra.mxu0 %v2017
      %v2200 = vpop.f32.mrf.mxu0
      %v2201 = vadd.f32 0.0, %v2200
      %v2202 = vpop.f32.mrf.mxu0
      %2203 = vmatprep.mubr.f32.mxu0 0.0
      %2204 = vmatmul.mubr.f32.gmra.mxu0 %v2020
      %v2205 = vpop.f32.mrf.mxu0
      %v2206 = vadd.f32 0.0, %v2205
      %v2207 = vpop.f32.mrf.mxu0
      %2208 = vmatprep.mubr.f32.mxu0 0.0
      %2209 = vmatmul.mubr.f32.gmra.mxu0 %v2023
      %v2210 = vpop.f32.mrf.mxu0
      %v2211 = vadd.f32 0.0, %v2210
      %v2212 = vpop.f32.mrf.mxu0
      %2213 = vmatprep.mubr.f32.mxu0 0.0
      %2214 = vmatmul.mubr.f32.gmra.mxu0 %v2026
      %v2215 = vpop.f32.mrf.mxu0
      %v2216 = vadd.f32 0.0, %v2215
      %v2217 = vpop.f32.mrf.mxu0
      %2218 = vmatprep.mubr.f32.mxu0 0.0
      %2219 = vmatmul.mubr.f32.gmra.mxu0 %v2029
      %v2220 = vpop.f32.mrf.mxu0
      %v2221 = vadd.f32 0.0, %v2220
      %v2222 = vpop.f32.mrf.mxu0
      %2223 = vmatprep.mubr.f32.mxu0 0.0
      %2224 = vmatmul.mubr.f32.gmra.mxu0 %v2032
      %v2225 = vpop.f32.mrf.mxu0
      %v2226 = vadd.f32 0.0, %v2225
      %v2227 = vpop.f32.mrf.mxu0
      %2228 = vmatprep.mubr.f32.mxu0 0.0
      %2229 = vmatmul.mubr.f32.gmra.mxu0 %v2035
      %v2230 = vpop.f32.mrf.mxu0
      %v2231 = vadd.f32 0.0, %v2230
      %v2232 = vpop.f32.mrf.mxu0
      %2233 = vmatprep.mubr.f32.mxu0 0.0
      %2234 = vmatmul.mubr.f32.gmra.mxu0 %v2038
      %v2235 = vpop.f32.mrf.mxu0
      %v2236 = vadd.f32 0.0, %v2235
      %v2237 = vpop.f32.mrf.mxu0
      %2238 = vmatprep.mubr.f32.mxu0 0.0
      %2239 = vmatmul.mubr.f32.gmra.mxu0 %v2041
      %v2240 = vpop.f32.mrf.mxu0
      %v2241 = vadd.f32 0.0, %v2240
      %v2242 = vpop.f32.mrf.mxu0
      %2243 = vmatprep.mubr.f32.mxu0 0.0
      %2244 = vmatmul.mubr.f32.gmra.mxu0 %v2044
      %v2245 = vpop.f32.mrf.mxu0
      %v2246 = vadd.f32 0.0, %v2245
      %v2247 = vpop.f32.mrf.mxu0
      %2248 = vmatprep.mubr.f32.mxu0 0.0
      %2249 = vmatmul.mubr.f32.gmra.mxu0 %v2047
      %v2250 = vpop.f32.mrf.mxu0
      %v2251 = vadd.f32 0.0, %v2250
      %v2252 = vpop.f32.mrf.mxu0
      %2253 = vmatprep.mubr.f32.mxu0 0.0
      %2254 = vmatmul.mubr.f32.gmra.mxu0 %v2050
      %v2255 = vpop.f32.mrf.mxu0
      %v2256 = vadd.f32 0.0, %v2255
      %v2257 = vpop.f32.mrf.mxu0
      %2258 = vmatprep.mubr.f32.mxu0 0.0
      %2259 = vmatmul.mubr.f32.gmra.mxu0 %v2053
      %v2260 = vpop.f32.mrf.mxu0
      %v2261 = vadd.f32 0.0, %v2260
      %v2262 = vpop.f32.mrf.mxu0
      %2263 = vmatprep.mubr.f32.mxu0 0.0
      %2264 = vmatmul.mubr.f32.gmra.mxu0 %v2056
      %v2265 = vpop.f32.mrf.mxu0
      %v2266 = vadd.f32 0.0, %v2265
      %v2267 = vpop.f32.mrf.mxu0
      %2268 = vmatprep.mubr.f32.mxu0 0.0
      %2269 = vmatmul.mubr.f32.gmra.mxu0 %v2059
      %v2270 = vpop.f32.mrf.mxu0
      %v2271 = vadd.f32 0.0, %v2270
      %v2272 = vpop.f32.mrf.mxu0
      %2273 = vmatprep.mubr.f32.mxu0 0.0
      %2274 = vmatmul.mubr.f32.gmra.mxu0 %v2062
      %v2275 = vpop.f32.mrf.mxu0
      %v2276 = vadd.f32 0.0, %v2275
      %v2277 = vpop.f32.mrf.mxu0
      %2278 = vmatprep.mubr.f32.mxu0 0.0
      %2279 = vmatmul.mubr.f32.gmra.mxu0 %v2065
      %v2280 = vpop.f32.mrf.mxu0
      %v2281 = vadd.f32 0.0, %v2280
      %v2282 = vpop.f32.mrf.mxu0
      %2283 = vmatprep.mubr.f32.mxu0 0.0
      %2284 = vmatmul.mubr.f32.gmra.mxu0 %v2068
      %v2285 = vpop.f32.mrf.mxu0
      %v2286 = vadd.f32 0.0, %v2285
      %v2287 = vpop.f32.mrf.mxu0
      %2288 = vmatprep.mubr.f32.mxu0 0.0
      %2289 = vmatmul.mubr.f32.gmra.mxu0 %v2071
      %v2290 = vpop.f32.mrf.mxu0
      %v2291 = vadd.f32 0.0, %v2290
      %v2292 = vpop.f32.mrf.mxu0
      %2293 = vmatprep.mubr.f32.mxu0 0.0
      %2294 = vmatmul.mubr.f32.gmra.mxu0 %v2074
      %v2295 = vpop.f32.mrf.mxu0
      %v2296 = vadd.f32 0.0, %v2295
      %v2297 = vpop.f32.mrf.mxu0
      %2298 = vmatprep.mubr.f32.mxu0 0.0
      %2299 = vmatmul.mubr.f32.gmra.mxu0 %v2077
      %v2300 = vpop.f32.mrf.mxu0
      %v2301 = vadd.f32 0.0, %v2300
      %v2302 = vpop.f32.mrf.mxu0
      %2303 = vmatprep.mubr.f32.mxu0 0.0
      %2304 = vmatmul.mubr.f32.gmra.mxu0 %v2080
      %v2305 = vpop.f32.mrf.mxu0
      %v2306 = vadd.f32 0.0, %v2305
      %v2307 = vpop.f32.mrf.mxu0
      %2308 = vmatprep.mubr.f32.mxu0 0.0
      %2309 = vmatmul.mubr.f32.gmra.mxu0 %v2083
      %v2310 = vpop.f32.mrf.mxu0
      %v2311 = vadd.f32 0.0, %v2310
      %v2312 = vpop.f32.mrf.mxu0
      %2313 = vdwg.mxu0
      %v2314 = vld [vmem:[%s2] sm:$0x1]
      %v2316 = vlaneseq
      %v2317 = vshrl.u32 %v2316, 7
      %v2318 = vsub.s32 0, %v2317
      %v2319 = vrot.slane %v2314, %v2318
      %v2321 = vmul.f32 %v2156, %v2319
      %v2322 = vmul.f32 %v2161, %v2319
      %v2323 = vmul.f32 %v2166, %v2319
      %v2324 = vmul.f32 %v2171, %v2319
      %v2325 = vmul.f32 %v2176, %v2319
      %v2326 = vmul.f32 %v2181, %v2319
      %v2327 = vmul.f32 %v2186, %v2319
      %v2328 = vmul.f32 %v2191, %v2319
      %v2329 = vmul.f32 %v2196, %v2319
      %v2330 = vmul.f32 %v2201, %v2319
      %v2331 = vmul.f32 %v2206, %v2319
      %v2332 = vmul.f32 %v2211, %v2319
      %v2333 = vmul.f32 %v2216, %v2319
      %v2334 = vmul.f32 %v2221, %v2319
      %v2335 = vmul.f32 %v2226, %v2319
      %v2336 = vmul.f32 %v2231, %v2319
      %v2337 = vmul.f32 %v2236, %v2319
      %v2338 = vmul.f32 %v2241, %v2319
      %v2339 = vmul.f32 %v2246, %v2319
      %v2340 = vmul.f32 %v2251, %v2319
      %v2341 = vmul.f32 %v2256, %v2319
      %v2342 = vmul.f32 %v2261, %v2319
      %v2343 = vmul.f32 %v2266, %v2319
      %v2344 = vmul.f32 %v2271, %v2319
      %v2345 = vmul.f32 %v2276, %v2319
      %v2346 = vmul.f32 %v2281, %v2319
      %v2347 = vmul.f32 %v2286, %v2319
      %v2348 = vmul.f32 %v2291, %v2319
      %v2349 = vmul.f32 %v2296, %v2319
      %v2350 = vmul.f32 %v2301, %v2319
      %v2351 = vmul.f32 %v2306, %v2319
      %v2352 = vmul.f32 %v2311, %v2319
      %v2353 = vld [vmem:[%s3] sm:$0x1]
      %v2355 = vlaneseq
      %v2356 = vshrl.u32 %v2355, 7
      %v2357 = vsub.s32 0, %v2356
      %v2358 = vrot.slane %v2353, %v2357
      %v2360 = vadd.f32 %v2321, %v2358
      %v2361 = vadd.f32 %v2322, %v2358
      %v2362 = vadd.f32 %v2323, %v2358
      %v2363 = vadd.f32 %v2324, %v2358
      %v2364 = vadd.f32 %v2325, %v2358
      %v2365 = vadd.f32 %v2326, %v2358
      %v2366 = vadd.f32 %v2327, %v2358
      %v2367 = vadd.f32 %v2328, %v2358
      %v2368 = vadd.f32 %v2329, %v2358
      %v2369 = vadd.f32 %v2330, %v2358
      %v2370 = vadd.f32 %v2331, %v2358
      %v2371 = vadd.f32 %v2332, %v2358
      %v2372 = vadd.f32 %v2333, %v2358
      %v2373 = vadd.f32 %v2334, %v2358
      %v2374 = vadd.f32 %v2335, %v2358
      %v2375 = vadd.f32 %v2336, %v2358
      %v2376 = vadd.f32 %v2337, %v2358
      %v2377 = vadd.f32 %v2338, %v2358
      %v2378 = vadd.f32 %v2339, %v2358
      %v2379 = vadd.f32 %v2340, %v2358
      %v2380 = vadd.f32 %v2341, %v2358
      %v2381 = vadd.f32 %v2342, %v2358
      %v2382 = vadd.f32 %v2343, %v2358
      %v2383 = vadd.f32 %v2344, %v2358
      %v2384 = vadd.f32 %v2345, %v2358
      %v2385 = vadd.f32 %v2346, %v2358
      %v2386 = vadd.f32 %v2347, %v2358
      %v2387 = vadd.f32 %v2348, %v2358
      %v2388 = vadd.f32 %v2349, %v2358
      %v2389 = vadd.f32 %v2350, %v2358
      %v2390 = vadd.f32 %v2351, %v2358
      %v2391 = vadd.f32 %v2352, %v2358
      %v2392 = vmax.f32 %v2360, 0.0
      %v2393 = vmax.f32 %v2361, 0.0
      %v2394 = vmax.f32 %v2362, 0.0
      %v2395 = vmax.f32 %v2363, 0.0
      %v2396 = vmax.f32 %v2364, 0.0
      %v2397 = vmax.f32 %v2365, 0.0
      %v2398 = vmax.f32 %v2366, 0.0
      %v2399 = vmax.f32 %v2367, 0.0
      %v2400 = vmax.f32 %v2368, 0.0
      %v2401 = vmax.f32 %v2369, 0.0
      %v2402 = vmax.f32 %v2370, 0.0
      %v2403 = vmax.f32 %v2371, 0.0
      %v2404 = vmax.f32 %v2372, 0.0
      %v2405 = vmax.f32 %v2373, 0.0
      %v2406 = vmax.f32 %v2374, 0.0
      %v2407 = vmax.f32 %v2375, 0.0
      %v2408 = vmax.f32 %v2376, 0.0
      %v2409 = vmax.f32 %v2377, 0.0
      %v2410 = vmax.f32 %v2378, 0.0
      %v2411 = vmax.f32 %v2379, 0.0
      %v2412 = vmax.f32 %v2380, 0.0
      %v2413 = vmax.f32 %v2381, 0.0
      %v2414 = vmax.f32 %v2382, 0.0
      %v2415 = vmax.f32 %v2383, 0.0
      %v2416 = vmax.f32 %v2384, 0.0
      %v2417 = vmax.f32 %v2385, 0.0
      %v2418 = vmax.f32 %v2386, 0.0
      %v2419 = vmax.f32 %v2387, 0.0
      %v2420 = vmax.f32 %v2388, 0.0
      %v2421 = vmax.f32 %v2389, 0.0
      %v2422 = vmax.f32 %v2390, 0.0
      %v2423 = vmax.f32 %v2391, 0.0
      %vm2424 = vcmask 64512
      %2425 = vst.msk [vmem:[%s197] sm:$0xff] %vm2424, %v2392
      %2426 = vst.msk [vmem:[%s197 + $0x8] sm:$0xff] %vm2424, %v2393
      %2427 = vst.msk [vmem:[%s197 + $0x10] sm:$0xff] %vm2424, %v2392
      %2428 = vst.msk [vmem:[%s197 + $0x18] sm:$0xff] %vm2424, %v2393
      %2429 = vst.msk [vmem:[%s197 + $0x20] sm:$0xff] %vm2424, %v2394
      %2430 = vst.msk [vmem:[%s197 + $0x28] sm:$0xff] %vm2424, %v2395
      %2431 = vst.msk [vmem:[%s197 + $0x30] sm:$0xff] %vm2424, %v2394
      %2432 = vst.msk [vmem:[%s197 + $0x38] sm:$0xff] %vm2424, %v2395
      %2433 = vst.msk [vmem:[%s197 + $0x40] sm:$0xff] %vm2424, %v2396
      %2434 = vst.msk [vmem:[%s197 + $0x48] sm:$0xff] %vm2424, %v2397
      %2435 = vst.msk [vmem:[%s197 + $0x50] sm:$0xff] %vm2424, %v2396
      %2436 = vst.msk [vmem:[%s197 + $0x58] sm:$0xff] %vm2424, %v2397
      %2437 = vst.msk [vmem:[%s197 + $0x60] sm:$0xff] %vm2424, %v2398
      %2438 = vst.msk [vmem:[%s197 + $0x68] sm:$0xff] %vm2424, %v2399
      %2439 = vst.msk [vmem:[%s197 + $0x70] sm:$0xff] %vm2424, %v2398
      %2440 = vst.msk [vmem:[%s197 + $0x78] sm:$0xff] %vm2424, %v2399
      %2441 = vst.msk [vmem:[%s197 + $0x80] sm:$0xff] %vm2424, %v2400
      %2442 = vst.msk [vmem:[%s197 + $0x88] sm:$0xff] %vm2424, %v2401
      %2443 = vst.msk [vmem:[%s197 + $0x90] sm:$0xff] %vm2424, %v2400
      %2444 = vst.msk [vmem:[%s197 + $0x98] sm:$0xff] %vm2424, %v2401
      %2445 = vst.msk [vmem:[%s197 + $0xa0] sm:$0xff] %vm2424, %v2402
      %2446 = vst.msk [vmem:[%s197 + $0xa8] sm:$0xff] %vm2424, %v2403
      %2447 = vst.msk [vmem:[%s197 + $0xb0] sm:$0xff] %vm2424, %v2402
      %2448 = vst.msk [vmem:[%s197 + $0xb8] sm:$0xff] %vm2424, %v2403
      %2449 = vst.msk [vmem:[%s197 + $0xc0] sm:$0xff] %vm2424, %v2404
      %2450 = vst.msk [vmem:[%s197 + $0xc8] sm:$0xff] %vm2424, %v2405
      %2451 = vst.msk [vmem:[%s197 + $0xd0] sm:$0xff] %vm2424, %v2404
      %2452 = vst.msk [vmem:[%s197 + $0xd8] sm:$0xff] %vm2424, %v2405
      %2453 = vst.msk [vmem:[%s197 + $0xe0] sm:$0xff] %vm2424, %v2406
      %2454 = vst.msk [vmem:[%s197 + $0xe8] sm:$0xff] %vm2424, %v2407
      %2455 = vst.msk [vmem:[%s197 + $0xf0] sm:$0xff] %vm2424, %v2406
      %2456 = vst.msk [vmem:[%s197 + $0xf8] sm:$0xff] %vm2424, %v2407
      %2457 = vst.msk [vmem:[%s197 + $0x100] sm:$0xff] %vm2424, %v2408
      %2458 = vst.msk [vmem:[%s197 + $0x108] sm:$0xff] %vm2424, %v2409
      %2459 = vst.msk [vmem:[%s197 + $0x110] sm:$0xff] %vm2424, %v2408
      %2460 = vst.msk [vmem:[%s197 + $0x118] sm:$0xff] %vm2424, %v2409
      %2461 = vst.msk [vmem:[%s197 + $0x120] sm:$0xff] %vm2424, %v2410
      %2462 = vst.msk [vmem:[%s197 + $0x128] sm:$0xff] %vm2424, %v2411
      %2463 = vst.msk [vmem:[%s197 + $0x130] sm:$0xff] %vm2424, %v2410
      %2464 = vst.msk [vmem:[%s197 + $0x138] sm:$0xff] %vm2424, %v2411
      %2465 = vst.msk [vmem:[%s197 + $0x140] sm:$0xff] %vm2424, %v2412
      %2466 = vst.msk [vmem:[%s197 + $0x148] sm:$0xff] %vm2424, %v2413
      %2467 = vst.msk [vmem:[%s197 + $0x150] sm:$0xff] %vm2424, %v2412
      %2468 = vst.msk [vmem:[%s197 + $0x158] sm:$0xff] %vm2424, %v2413
      %2469 = vst.msk [vmem:[%s197 + $0x160] sm:$0xff] %vm2424, %v2414
      %2470 = vst.msk [vmem:[%s197 + $0x168] sm:$0xff] %vm2424, %v2415
      %2471 = vst.msk [vmem:[%s197 + $0x170] sm:$0xff] %vm2424, %v2414
      %2472 = vst.msk [vmem:[%s197 + $0x178] sm:$0xff] %vm2424, %v2415
      %2473 = vst.msk [vmem:[%s197 + $0x180] sm:$0xff] %vm2424, %v2416
      %2474 = vst.msk [vmem:[%s197 + $0x188] sm:$0xff] %vm2424, %v2417
      %2475 = vst.msk [vmem:[%s197 + $0x190] sm:$0xff] %vm2424, %v2416
      %2476 = vst.msk [vmem:[%s197 + $0x198] sm:$0xff] %vm2424, %v2417
      %2477 = vst.msk [vmem:[%s197 + $0x1a0] sm:$0xff] %vm2424, %v2418
      %2478 = vst.msk [vmem:[%s197 + $0x1a8] sm:$0xff] %vm2424, %v2419
      %2479 = vst.msk [vmem:[%s197 + $0x1b0] sm:$0xff] %vm2424, %v2418
      %2480 = vst.msk [vmem:[%s197 + $0x1b8] sm:$0xff] %vm2424, %v2419
      %2481 = vst.msk [vmem:[%s197 + $0x1c0] sm:$0xff] %vm2424, %v2420
      %2482 = vst.msk [vmem:[%s197 + $0x1c8] sm:$0xff] %vm2424, %v2421
      %2483 = vst.msk [vmem:[%s197 + $0x1d0] sm:$0xff] %vm2424, %v2420
      %2484 = vst.msk [vmem:[%s197 + $0x1d8] sm:$0xff] %vm2424, %v2421
      %2485 = vst.msk [vmem:[%s197 + $0x1e0] sm:$0xff] %vm2424, %v2422
      %2486 = vst.msk [vmem:[%s197 + $0x1e8] sm:$0xff] %vm2424, %v2423
      %2487 = vst.msk [vmem:[%s197 + $0x1f0] sm:$0xff] %vm2424, %v2422
      %2488 = vst.msk [vmem:[%s197 + $0x1f8] sm:$0xff] %vm2424, %v2423
      %2521 = vrot.lane.b32.xlu0 %v2392, 8
      %v2522 = vpop.permute.xlu0 %2521
      %2523 = vrot.lane.b32.xlu0 %v2393, 8
      %v2524 = vpop.permute.xlu0 %2523
      %2525 = vrot.lane.b32.xlu0 %v2394, 8
      %v2526 = vpop.permute.xlu0 %2525
      %2527 = vrot.lane.b32.xlu0 %v2395, 8
      %v2528 = vpop.permute.xlu0 %2527
      %2529 = vrot.lane.b32.xlu0 %v2396, 8
      %v2530 = vpop.permute.xlu0 %2529
      %2531 = vrot.lane.b32.xlu0 %v2397, 8
      %v2532 = vpop.permute.xlu0 %2531
      %2533 = vrot.lane.b32.xlu0 %v2398, 8
      %v2534 = vpop.permute.xlu0 %2533
      %2535 = vrot.lane.b32.xlu0 %v2399, 8
      %v2536 = vpop.permute.xlu0 %2535
      %2537 = vrot.lane.b32.xlu0 %v2400, 8
      %v2538 = vpop.permute.xlu0 %2537
      %2539 = vrot.lane.b32.xlu0 %v2401, 8
      %v2540 = vpop.permute.xlu0 %2539
      %2541 = vrot.lane.b32.xlu0 %v2402, 8
      %v2542 = vpop.permute.xlu0 %2541
      %2543 = vrot.lane.b32.xlu0 %v2403, 8
      %v2544 = vpop.permute.xlu0 %2543
      %2545 = vrot.lane.b32.xlu0 %v2404, 8
      %v2546 = vpop.permute.xlu0 %2545
      %2547 = vrot.lane.b32.xlu0 %v2405, 8
      %v2548 = vpop.permute.xlu0 %2547
      %2549 = vrot.lane.b32.xlu0 %v2406, 8
      %v2550 = vpop.permute.xlu0 %2549
      %2551 = vrot.lane.b32.xlu0 %v2407, 8
      %v2552 = vpop.permute.xlu0 %2551
      %2553 = vrot.lane.b32.xlu0 %v2408, 8
      %v2554 = vpop.permute.xlu0 %2553
      %2555 = vrot.lane.b32.xlu0 %v2409, 8
      %v2556 = vpop.permute.xlu0 %2555
      %2557 = vrot.lane.b32.xlu0 %v2410, 8
      %v2558 = vpop.permute.xlu0 %2557
      %2559 = vrot.lane.b32.xlu0 %v2411, 8
      %v2560 = vpop.permute.xlu0 %2559
      %2561 = vrot.lane.b32.xlu0 %v2412, 8
      %v2562 = vpop.permute.xlu0 %2561
      %2563 = vrot.lane.b32.xlu0 %v2413, 8
      %v2564 = vpop.permute.xlu0 %2563
      %2565 = vrot.lane.b32.xlu0 %v2414, 8
      %v2566 = vpop.permute.xlu0 %2565
      %2567 = vrot.lane.b32.xlu0 %v2415, 8
      %v2568 = vpop.permute.xlu0 %2567
      %2569 = vrot.lane.b32.xlu0 %v2416, 8
      %v2570 = vpop.permute.xlu0 %2569
      %2571 = vrot.lane.b32.xlu0 %v2417, 8
      %v2572 = vpop.permute.xlu0 %2571
      %2573 = vrot.lane.b32.xlu0 %v2418, 8
      %v2574 = vpop.permute.xlu0 %2573
      %2575 = vrot.lane.b32.xlu0 %v2419, 8
      %v2576 = vpop.permute.xlu0 %2575
      %2577 = vrot.lane.b32.xlu0 %v2420, 8
      %v2578 = vpop.permute.xlu0 %2577
      %2579 = vrot.lane.b32.xlu0 %v2421, 8
      %v2580 = vpop.permute.xlu0 %2579
      %2581 = vrot.lane.b32.xlu0 %v2422, 8
      %v2582 = vpop.permute.xlu0 %2581
      %2583 = vrot.lane.b32.xlu0 %v2423, 8
      %v2584 = vpop.permute.xlu0 %2583
      %vm2617 = vcmask 130112
      %2618 = vst.msk [vmem:[%s197] sm:$0xff] %vm2617, %v2522
      %2619 = vst.msk [vmem:[%s197 + $0x8] sm:$0xff] %vm2617, %v2524
      %2620 = vst.msk [vmem:[%s197 + $0x10] sm:$0xff] %vm2617, %v2522
      %2621 = vst.msk [vmem:[%s197 + $0x18] sm:$0xff] %vm2617, %v2524
      %2622 = vst.msk [vmem:[%s197 + $0x20] sm:$0xff] %vm2617, %v2526
      %2623 = vst.msk [vmem:[%s197 + $0x28] sm:$0xff] %vm2617, %v2528
      %2624 = vst.msk [vmem:[%s197 + $0x30] sm:$0xff] %vm2617, %v2526
      %2625 = vst.msk [vmem:[%s197 + $0x38] sm:$0xff] %vm2617, %v2528
      %2626 = vst.msk [vmem:[%s197 + $0x40] sm:$0xff] %vm2617, %v2530
      %2627 = vst.msk [vmem:[%s197 + $0x48] sm:$0xff] %vm2617, %v2532
      %2628 = vst.msk [vmem:[%s197 + $0x50] sm:$0xff] %vm2617, %v2530
      %2629 = vst.msk [vmem:[%s197 + $0x58] sm:$0xff] %vm2617, %v2532
      %2630 = vst.msk [vmem:[%s197 + $0x60] sm:$0xff] %vm2617, %v2534
      %2631 = vst.msk [vmem:[%s197 + $0x68] sm:$0xff] %vm2617, %v2536
      %2632 = vst.msk [vmem:[%s197 + $0x70] sm:$0xff] %vm2617, %v2534
      %2633 = vst.msk [vmem:[%s197 + $0x78] sm:$0xff] %vm2617, %v2536
      %2634 = vst.msk [vmem:[%s197 + $0x80] sm:$0xff] %vm2617, %v2538
      %2635 = vst.msk [vmem:[%s197 + $0x88] sm:$0xff] %vm2617, %v2540
      %2636 = vst.msk [vmem:[%s197 + $0x90] sm:$0xff] %vm2617, %v2538
      %2637 = vst.msk [vmem:[%s197 + $0x98] sm:$0xff] %vm2617, %v2540
      %2638 = vst.msk [vmem:[%s197 + $0xa0] sm:$0xff] %vm2617, %v2542
      %2639 = vst.msk [vmem:[%s197 + $0xa8] sm:$0xff] %vm2617, %v2544
      %2640 = vst.msk [vmem:[%s197 + $0xb0] sm:$0xff] %vm2617, %v2542
      %2641 = vst.msk [vmem:[%s197 + $0xb8] sm:$0xff] %vm2617, %v2544
      %2642 = vst.msk [vmem:[%s197 + $0xc0] sm:$0xff] %vm2617, %v2546
      %2643 = vst.msk [vmem:[%s197 + $0xc8] sm:$0xff] %vm2617, %v2548
      %2644 = vst.msk [vmem:[%s197 + $0xd0] sm:$0xff] %vm2617, %v2546
      %2645 = vst.msk [vmem:[%s197 + $0xd8] sm:$0xff] %vm2617, %v2548
      %2646 = vst.msk [vmem:[%s197 + $0xe0] sm:$0xff] %vm2617, %v2550
      %2647 = vst.msk [vmem:[%s197 + $0xe8] sm:$0xff] %vm2617, %v2552
      %2648 = vst.msk [vmem:[%s197 + $0xf0] sm:$0xff] %vm2617, %v2550
      %2649 = vst.msk [vmem:[%s197 + $0xf8] sm:$0xff] %vm2617, %v2552
      %2650 = vst.msk [vmem:[%s197 + $0x100] sm:$0xff] %vm2617, %v2554
      %2651 = vst.msk [vmem:[%s197 + $0x108] sm:$0xff] %vm2617, %v2556
      %2652 = vst.msk [vmem:[%s197 + $0x110] sm:$0xff] %vm2617, %v2554
      %2653 = vst.msk [vmem:[%s197 + $0x118] sm:$0xff] %vm2617, %v2556
      %2654 = vst.msk [vmem:[%s197 + $0x120] sm:$0xff] %vm2617, %v2558
      %2655 = vst.msk [vmem:[%s197 + $0x128] sm:$0xff] %vm2617, %v2560
      %2656 = vst.msk [vmem:[%s197 + $0x130] sm:$0xff] %vm2617, %v2558
      %2657 = vst.msk [vmem:[%s197 + $0x138] sm:$0xff] %vm2617, %v2560
      %2658 = vst.msk [vmem:[%s197 + $0x140] sm:$0xff] %vm2617, %v2562
      %2659 = vst.msk [vmem:[%s197 + $0x148] sm:$0xff] %vm2617, %v2564
      %2660 = vst.msk [vmem:[%s197 + $0x150] sm:$0xff] %vm2617, %v2562
      %2661 = vst.msk [vmem:[%s197 + $0x158] sm:$0xff] %vm2617, %v2564
      %2662 = vst.msk [vmem:[%s197 + $0x160] sm:$0xff] %vm2617, %v2566
      %2663 = vst.msk [vmem:[%s197 + $0x168] sm:$0xff] %vm2617, %v2568
      %2664 = vst.msk [vmem:[%s197 + $0x170] sm:$0xff] %vm2617, %v2566
      %2665 = vst.msk [vmem:[%s197 + $0x178] sm:$0xff] %vm2617, %v2568
      %2666 = vst.msk [vmem:[%s197 + $0x180] sm:$0xff] %vm2617, %v2570
      %2667 = vst.msk [vmem:[%s197 + $0x188] sm:$0xff] %vm2617, %v2572
      %2668 = vst.msk [vmem:[%s197 + $0x190] sm:$0xff] %vm2617, %v2570
      %2669 = vst.msk [vmem:[%s197 + $0x198] sm:$0xff] %vm2617, %v2572
      %2670 = vst.msk [vmem:[%s197 + $0x1a0] sm:$0xff] %vm2617, %v2574
      %2671 = vst.msk [vmem:[%s197 + $0x1a8] sm:$0xff] %vm2617, %v2576
      %2672 = vst.msk [vmem:[%s197 + $0x1b0] sm:$0xff] %vm2617, %v2574
      %2673 = vst.msk [vmem:[%s197 + $0x1b8] sm:$0xff] %vm2617, %v2576
      %2674 = vst.msk [vmem:[%s197 + $0x1c0] sm:$0xff] %vm2617, %v2578
      %2675 = vst.msk [vmem:[%s197 + $0x1c8] sm:$0xff] %vm2617, %v2580
      %2676 = vst.msk [vmem:[%s197 + $0x1d0] sm:$0xff] %vm2617, %v2578
      %2677 = vst.msk [vmem:[%s197 + $0x1d8] sm:$0xff] %vm2617, %v2580
      %2678 = vst.msk [vmem:[%s197 + $0x1e0] sm:$0xff] %vm2617, %v2582
      %2679 = vst.msk [vmem:[%s197 + $0x1e8] sm:$0xff] %vm2617, %v2584
      %2680 = vst.msk [vmem:[%s197 + $0x1f0] sm:$0xff] %vm2617, %v2582
      %2681 = vst.msk [vmem:[%s197 + $0x1f8] sm:$0xff] %vm2617, %v2584
      %p2682 = scmp.lt.s32.totalorder %s15, 1
      %s2683 = scalar_select %p2682, %s15, 1
      %s2684 = smul.addr %s2683, 64
      %s2685 = smul.addr %s2684, 8
      %s2686 = scalar_lea.vmem %s4, %s2685
      // Predicated region
      $region37: #{decoder_block_forward.1} parent=35 // pred_check
        %p2687 = pneg %p122
      $region38: #{decoder_block_forward.1} parent=35 // pred_check_branch
        %2689 = sbr.rel (%p2687) target = $region40
      $region39: #{decoder_block_forward.1} parent=35 // pred_region
        _
      $region40: #{decoder_block_forward.1} parent=35 // pred_fallthru
        _
    $region36: #{decoder_block_forward.1} parent=5 // pred_fallthru
      _
    %p2690 = scmp.le.s32.totalorder 2, %s10
    // Predicated region
    $region41: #{decoder_block_forward.1} parent=5 // pred_check
      %p2691 = pneg %p2690
    $region42: #{decoder_block_forward.1} parent=5 // pred_check_branch
      %2693 = sbr.rel (%p2691) target = $region44
    $region43: #{decoder_block_forward.1} parent=5 // pred_region
      %s2694 = ssub.s32 %s10, 2
      // Predicated region
      $region45: #{decoder_block_forward.1} parent=43 // pred_check
        %p2695 = pneg %p128
      $region46: #{decoder_block_forward.1} parent=43 // pred_check_branch
        %2697 = sbr.rel (%p2695) target = $region48
      $region47: #{decoder_block_forward.1} parent=43 // pred_region
        %p2698 = scmp.lt.s32.totalorder %s16, 1
        %s2699 = scalar_select %p2698, %s16, 1
        %s2700 = smul.addr %s2699, 64
        %s2701 = smul.addr %s2700, 8
        %s2702 = scalar_lea.vmem %s4, %s2701
      $region48: #{decoder_block_forward.1} parent=43 // pred_fallthru
        _
    $region44: #{decoder_block_forward.1} parent=5 // pred_fallthru
      _
  $region6: #{decoder_block_forward.1} parent=0 // loop_footer
    %s14 = sadd.s32 1, %s10
  $region7: #{decoder_block_forward.1} parent=0 // loop_footer_branch
    %9 = sbr.rel target = $region3
  $region8: #{decoder_block_forward.1} parent=0 // loop_exit
    _

</llo_original>
